<compile_context>
chip_gen: v6e
topology: v6e:2x2x1
jax: 0.10.0
libtpu: 0.0.40
codegen_flags: <defaults>
</compile_context>

<pallas_src>
import jax
import jax.numpy as jnp
from jax.experimental import pallas as pl
from jax.experimental.pallas import tpu as pltpu


D_IN = 800      # input feature width
D_HID = 200     # per-branch hidden width
D_OUT = 11      # per-branch output width
TILE_B = 1024   # batch tile (only used when B > TILE_B)

_SQRT_2_OVER_PI = 0.7978845608028654
_GELU_C = 0.044715


# ----------------------------- in-kernel math -------------------------------

def _gelu_tanh(x):
    # tanh-approximation GELU; tanh lowers to the EUP so it stays off the VALU slot.
    return 0.5 * x * (1.0 + jnp.tanh(_SQRT_2_OVER_PI * (x + _GELU_C * x * x * x)))


# --------------------------------- kernel -----------------------------------

def ego_lanes_kernel(x_ref, w0_ref, b0_ref, w1_ref, b1_ref, w2_ref, b2_ref, out_ref):
    # x tile: [tile_b, 800] -> cast to bf16 for MXU; accumulate in f32.
    x = x_ref[...].astype(jnp.bfloat16)

    h0 = jnp.dot(x, w0_ref[...], preferred_element_type=jnp.float32) + b0_ref[...]
    h0 = _gelu_tanh(h0).astype(jnp.bfloat16)            # [tile_b, 400]

    h1 = jnp.dot(h0, w1_ref[...], preferred_element_type=jnp.float32) + b1_ref[...]
    h1 = _gelu_tanh(h1).astype(jnp.bfloat16)             # [tile_b, 400]

    y = jnp.dot(h1, w2_ref[...], preferred_element_type=jnp.float32) + b2_ref[...]
    out_ref[...] = y.astype(out_ref.dtype)                # [tile_b, 22]


# -------------------------------- wrapper -----------------------------------

def ego_lanes_head(feature_vector, packed):
    """feature_vector: [B, 800]. packed: dict from pack_params(). Returns (left, right)."""
    B = feature_vector.shape[0]
    w0, b0 = packed["w0"], packed["b0"]
    w1, b1 = packed["w1"], packed["b1"]
    w2, b2 = packed["w2"], packed["b2"]
    n_out = 2 * D_OUT

    if B <= TILE_B:
        tile_b = B          # single block == full batch (sidesteps (8,128) divisibility)
        pad_b = B
        x = feature_vector
    else:
        tile_b = TILE_B
        pad_b = pl.cdiv(B, tile_b) * tile_b
        x = feature_vector
        if pad_b != B:
            x = jnp.pad(x, ((0, pad_b - B), (0, 0)))
    grid = (pad_b // tile_b,)

    flops = 2 * pad_b * (D_IN * 2 * D_HID + (2 * D_HID) ** 2 + 2 * D_HID * n_out)
    transcendentals = pad_b * 4 * D_HID  # two GELU layers of width 400 (tanh each)
    bytes_accessed = (
        x.size * x.dtype.itemsize
        + pad_b * n_out * 4
        + sum(a.size * a.dtype.itemsize for a in (w0, b0, w1, b1, w2, b2))
    )

    out = pl.pallas_call(
        ego_lanes_kernel,
        out_shape=jax.ShapeDtypeStruct((pad_b, n_out), jnp.float32),
        grid_spec=pltpu.PrefetchScalarGridSpec(
            num_scalar_prefetch=0,
            grid=grid,
            in_specs=[
                pl.BlockSpec((tile_b, D_IN), lambda i: (i, 0)),   # x: tiled over batch
                pl.BlockSpec(w0.shape, lambda i: (0, 0)),         # weights: VMEM-resident
                pl.BlockSpec(b0.shape, lambda i: (0, 0)),
                pl.BlockSpec(w1.shape, lambda i: (0, 0)),
                pl.BlockSpec(b1.shape, lambda i: (0, 0)),
                pl.BlockSpec(w2.shape, lambda i: (0, 0)),
                pl.BlockSpec(b2.shape, lambda i: (0, 0)),
            ],
            out_specs=pl.BlockSpec((tile_b, n_out), lambda i: (i, 0)),
        ),
        compiler_params=pltpu.CompilerParams(
            dimension_semantics=("parallel",),
        ),
        cost_estimate=pl.CostEstimate(
            flops=flops,
            transcendentals=transcendentals,
            bytes_accessed=bytes_accessed,
        ),
    )(x, w0, b0, w1, b1, w2, b2)

    out = out[:B]
    return out[:, :D_OUT], out[:, D_OUT:]


# ---------------------------- parameter setup --------------------------------

def init_params(key):
    """Deterministic synthetic params matching nn.Linear shapes.
    Stored as [in, out] (transposed vs. PyTorch's [out, in]); biases as [1, out]."""
    dims = [
        ("w0l", "b0l", D_IN, D_HID),
        ("w1l", "b1l", D_HID, D_HID),
        ("w2l", "b2l", D_HID, D_OUT),
        ("w0r", "b0r", D_IN, D_HID),
        ("w1r", "b1r", D_HID, D_HID),
        ("w2r", "b2r", D_HID, D_OUT),
    ]
    params = {}
    for wname, bname, fin, fout in dims:
        key, kw, kb = jax.random.split(key, 3)
        bound = 1.0 / (fin ** 0.5)  # PyTorch default Linear init range
        params[wname] = jax.random.uniform(
            kw, (fin, fout), jnp.float32, minval=-bound, maxval=bound
        )
        params[bname] = jax.random.uniform(
            kb, (1, fout), jnp.float32, minval=-bound, maxval=bound
        )
    return params


def pack_params(p):
    """Fuse left/right branch weights into wide / block-diagonal bf16 matrices."""
    bf16, f32 = jnp.bfloat16, jnp.float32
    z_hh = jnp.zeros((D_HID, D_HID), f32)
    z_ho = jnp.zeros((D_HID, D_OUT), f32)

    w0 = jnp.concatenate([p["w0l"], p["w0r"]], axis=1).astype(bf16)          # [800, 400]
    b0 = jnp.concatenate([p["b0l"], p["b0r"]], axis=1).astype(f32)           # [1, 400]
    w1 = jnp.block([[p["w1l"], z_hh], [z_hh, p["w1r"]]]).astype(bf16)        # [400, 400]
    b1 = jnp.concatenate([p["b1l"], p["b1r"]], axis=1).astype(f32)           # [1, 400]
    w2 = jnp.block([[p["w2l"], z_ho], [z_ho, p["w2r"]]]).astype(bf16)        # [400, 22]
    b2 = jnp.concatenate([p["b2l"], p["b2r"]], axis=1).astype(f32)           # [1, 22]
    return dict(w0=w0, b0=b0, w1=w1, b1=b1, w2=w2, b2=b2)


# ------------------------------- reference -----------------------------------

def _reference(x, p):
    """Pure-JAX f32 reference with exact (erf) GELU — mirrors the PyTorch module."""
    def gelu(v):
        return 0.5 * v * (1.0 + jax.scipy.special.erf(v * 0.7071067811865476))

    def branch(w0, b0, w1, b1, w2, b2):
        h0 = gelu(x @ w0 + b0)
        h1 = gelu(h0 @ w1 + b1)
        return h1 @ w2 + b2

    left = branch(p["w0l"], p["b0l"], p["w1l"], p["b1l"], p["w2l"], p["b2l"])
    right = branch(p["w0r"], p["b0r"], p["w1r"], p["b1r"], p["w2r"], p["b2r"])
    return left, right


if __name__ == "__main__":
    key = jax.random.PRNGKey(0)
    key, kx = jax.random.split(key)

    B = 2
    x = jax.random.normal(kx, (B, D_IN), jnp.float32)
    params = init_params(key)
    packed = pack_params(params)

    left, right = ego_lanes_head(x, packed)
    jax.block_until_ready((left, right))

    ref_left, ref_right = _reference(x, params)
    assert left.shape == (B, D_OUT) and right.shape == (B, D_OUT)
    # bf16 weights/activations + tanh-GELU vs f32/erf reference: allow ~5e-2 abs.
    assert jnp.max(jnp.abs(left - ref_left)) < 5e-2
    assert jnp.max(jnp.abs(right - ref_right)) < 5e-2

    print("KERNEL_OK")
</pallas_src>

<mosaic_0001>
module attributes {stable_mosaic.version = 11 : i64} {
  func.func @ego_lanes_kernel(%arg0: i32, %arg1: memref<2x800xf32, #tpu.memory_space<vmem>>, %arg2: memref<800x400xbf16, #tpu.memory_space<vmem>>, %arg3: memref<1x400xf32, #tpu.memory_space<vmem>>, %arg4: memref<400x400xbf16, #tpu.memory_space<vmem>>, %arg5: memref<1x400xf32, #tpu.memory_space<vmem>>, %arg6: memref<400x22xbf16, #tpu.memory_space<vmem>>, %arg7: memref<1x22xf32, #tpu.memory_space<vmem>>, %arg8: memref<2x22xf32, #tpu.memory_space<vmem>>) attributes {dimension_semantics = [#tpu.dimension_semantics<parallel>], iteration_bounds = array<i64: 1>, scalar_prefetch = 0 : i64, scratch_operands = 0 : i64, tpu.core_type = #tpu.core_type<tc>, window_params = [{transform_indices = @transform_0, window_bounds = array<i64: 2, 800>}, {pipeline_mode = #tpu.pipeline_mode<synchronous>, transform_indices = @transform_1, window_bounds = array<i64: 800, 400>}, {pipeline_mode = #tpu.pipeline_mode<synchronous>, transform_indices = @transform_2, window_bounds = array<i64: 1, 400>}, {pipeline_mode = #tpu.pipeline_mode<synchronous>, transform_indices = @transform_3, window_bounds = array<i64: 400, 400>}, {pipeline_mode = #tpu.pipeline_mode<synchronous>, transform_indices = @transform_4, window_bounds = array<i64: 1, 400>}, {pipeline_mode = #tpu.pipeline_mode<synchronous>, transform_indices = @transform_5, window_bounds = array<i64: 400, 22>}, {pipeline_mode = #tpu.pipeline_mode<synchronous>, transform_indices = @transform_6, window_bounds = array<i64: 1, 22>}, {transform_indices = @transform_7, window_bounds = array<i64: 2, 22>}]} {
    %c0 = arith.constant 0 : index
    %c0_0 = arith.constant 0 : index
    %0 = vector.load %arg1[%c0, %c0_0] : memref<2x800xf32, #tpu.memory_space<vmem>>, vector<2x800xf32>
    %1 = arith.truncf %0 : vector<2x800xf32> to vector<2x800xbf16>
    %c0_1 = arith.constant 0 : index
    %c0_2 = arith.constant 0 : index
    %2 = vector.load %arg2[%c0_1, %c0_2] : memref<800x400xbf16, #tpu.memory_space<vmem>>, vector<800x400xbf16>
    %cst = arith.constant dense<0.000000e+00> : vector<2x400xf32>
    %3 = tpu.matmul %1, %2, %cst {dimension_numbers = #tpu.dot_dimension_numbers<[1], [0], [0], [1], [0, 0, 1, 1], [], []>} : vector<2x800xbf16>, vector<800x400xbf16>, vector<2x400xf32> -> vector<2x400xf32>
    %c0_3 = arith.constant 0 : index
    %c0_4 = arith.constant 0 : index
    %4 = vector.load %arg3[%c0_3, %c0_4] : memref<1x400xf32, #tpu.memory_space<vmem>>, vector<1x400xf32>
    %5 = vector.broadcast %4 : vector<1x400xf32> to vector<2x400xf32>
    %6 = arith.addf %3, %5 : vector<2x400xf32>
    %cst_5 = arith.constant 5.000000e-01 : f32
    %7 = vector.broadcast %cst_5 : f32 to vector<2x400xf32>
    %8 = arith.mulf %7, %6 : vector<2x400xf32>
    %cst_6 = arith.constant 4.471500e-02 : f32
    %9 = vector.broadcast %cst_6 : f32 to vector<2x400xf32>
    %10 = arith.mulf %9, %6 : vector<2x400xf32>
    %11 = arith.mulf %10, %6 : vector<2x400xf32>
    %12 = arith.mulf %11, %6 : vector<2x400xf32>
    %13 = arith.addf %6, %12 : vector<2x400xf32>
    %cst_7 = arith.constant 0.797884583 : f32
    %14 = vector.broadcast %cst_7 : f32 to vector<2x400xf32>
    %15 = arith.mulf %14, %13 : vector<2x400xf32>
    %16 = math.tanh %15 : vector<2x400xf32>
    %cst_8 = arith.constant 1.000000e+00 : f32
    %17 = vector.broadcast %cst_8 : f32 to vector<2x400xf32>
    %18 = arith.addf %17, %16 : vector<2x400xf32>
    %19 = arith.mulf %8, %18 : vector<2x400xf32>
    %20 = arith.truncf %19 : vector<2x400xf32> to vector<2x400xbf16>
    %c0_9 = arith.constant 0 : index
    %c0_10 = arith.constant 0 : index
    %21 = vector.load %arg4[%c0_9, %c0_10] : memref<400x400xbf16, #tpu.memory_space<vmem>>, vector<400x400xbf16>
    %cst_11 = arith.constant dense<0.000000e+00> : vector<2x400xf32>
    %22 = tpu.matmul %20, %21, %cst_11 {dimension_numbers = #tpu.dot_dimension_numbers<[1], [0], [0], [1], [0, 0, 1, 1], [], []>} : vector<2x400xbf16>, vector<400x400xbf16>, vector<2x400xf32> -> vector<2x400xf32>
    %c0_12 = arith.constant 0 : index
    %c0_13 = arith.constant 0 : index
    %23 = vector.load %arg5[%c0_12, %c0_13] : memref<1x400xf32, #tpu.memory_space<vmem>>, vector<1x400xf32>
    %24 = vector.broadcast %23 : vector<1x400xf32> to vector<2x400xf32>
    %25 = arith.addf %22, %24 : vector<2x400xf32>
    %cst_14 = arith.constant 5.000000e-01 : f32
    %26 = vector.broadcast %cst_14 : f32 to vector<2x400xf32>
    %27 = arith.mulf %26, %25 : vector<2x400xf32>
    %cst_15 = arith.constant 4.471500e-02 : f32
    %28 = vector.broadcast %cst_15 : f32 to vector<2x400xf32>
    %29 = arith.mulf %28, %25 : vector<2x400xf32>
    %30 = arith.mulf %29, %25 : vector<2x400xf32>
    %31 = arith.mulf %30, %25 : vector<2x400xf32>
    %32 = arith.addf %25, %31 : vector<2x400xf32>
    %cst_16 = arith.constant 0.797884583 : f32
    %33 = vector.broadcast %cst_16 : f32 to vector<2x400xf32>
    %34 = arith.mulf %33, %32 : vector<2x400xf32>
    %35 = math.tanh %34 : vector<2x400xf32>
    %cst_17 = arith.constant 1.000000e+00 : f32
    %36 = vector.broadcast %cst_17 : f32 to vector<2x400xf32>
    %37 = arith.addf %36, %35 : vector<2x400xf32>
    %38 = arith.mulf %27, %37 : vector<2x400xf32>
    %39 = arith.truncf %38 : vector<2x400xf32> to vector<2x400xbf16>
    %c0_18 = arith.constant 0 : index
    %c0_19 = arith.constant 0 : index
    %40 = vector.load %arg6[%c0_18, %c0_19] : memref<400x22xbf16, #tpu.memory_space<vmem>>, vector<400x22xbf16>
    %cst_20 = arith.constant dense<0.000000e+00> : vector<2x22xf32>
    %41 = tpu.matmul %39, %40, %cst_20 {dimension_numbers = #tpu.dot_dimension_numbers<[1], [0], [0], [1], [0, 0, 1, 1], [], []>} : vector<2x400xbf16>, vector<400x22xbf16>, vector<2x22xf32> -> vector<2x22xf32>
    %c0_21 = arith.constant 0 : index
    %c0_22 = arith.constant 0 : index
    %42 = vector.load %arg7[%c0_21, %c0_22] : memref<1x22xf32, #tpu.memory_space<vmem>>, vector<1x22xf32>
    %43 = vector.broadcast %42 : vector<1x22xf32> to vector<2x22xf32>
    %44 = arith.addf %41, %43 : vector<2x22xf32>
    %c0_23 = arith.constant 0 : index
    %c0_24 = arith.constant 0 : index
    %45 = vector.load %arg8[%c0_23, %c0_24] : memref<2x22xf32, #tpu.memory_space<vmem>>, vector<2x22xf32>
    tpu.vector_store %arg8[%c0_23, %c0_24], %44 {strides = array<i32>} : memref<2x22xf32, #tpu.memory_space<vmem>>, vector<2x22xf32>,
    return
  }
  func.func @transform_0(%arg0: i32) -> (i32, i32) {
    %c0_i32 = arith.constant 0 : i32
    %c0_i32_0 = arith.constant 0 : i32
    return %arg0, %c0_i32 : i32, i32
  }
  func.func @transform_1(%arg0: i32) -> (i32, i32) {
    %c0_i32 = arith.constant 0 : i32
    %c0_i32_0 = arith.constant 0 : i32
    %c0_i32_1 = arith.constant 0 : i32
    return %c0_i32, %c0_i32_0 : i32, i32
  }
  func.func @transform_2(%arg0: i32) -> (i32, i32) {
    %c0_i32 = arith.constant 0 : i32
    %c0_i32_0 = arith.constant 0 : i32
    %c0_i32_1 = arith.constant 0 : i32
    return %c0_i32, %c0_i32_0 : i32, i32
  }
  func.func @transform_3(%arg0: i32) -> (i32, i32) {
    %c0_i32 = arith.constant 0 : i32
    %c0_i32_0 = arith.constant 0 : i32
    %c0_i32_1 = arith.constant 0 : i32
    return %c0_i32, %c0_i32_0 : i32, i32
  }
  func.func @transform_4(%arg0: i32) -> (i32, i32) {
    %c0_i32 = arith.constant 0 : i32
    %c0_i32_0 = arith.constant 0 : i32
    %c0_i32_1 = arith.constant 0 : i32
    return %c0_i32, %c0_i32_0 : i32, i32
  }
  func.func @transform_5(%arg0: i32) -> (i32, i32) {
    %c0_i32 = arith.constant 0 : i32
    %c0_i32_0 = arith.constant 0 : i32
    %c0_i32_1 = arith.constant 0 : i32
    return %c0_i32, %c0_i32_0 : i32, i32
  }
  func.func @transform_6(%arg0: i32) -> (i32, i32) {
    %c0_i32 = arith.constant 0 : i32
    %c0_i32_0 = arith.constant 0 : i32
    %c0_i32_1 = arith.constant 0 : i32
    return %c0_i32, %c0_i32_0 : i32, i32
  }
  func.func @transform_7(%arg0: i32) -> (i32, i32) {
    %c0_i32 = arith.constant 0 : i32
    %c0_i32_0 = arith.constant 0 : i32
    return %arg0, %c0_i32 : i32, i32
  }
}

</mosaic_0001>

<llo_original>
// kernel: tpu_custom_call.1
$region0: #{tpu_custom_call.1}
  #allocation0 [shape = 'u32[]', space=smem, size = 0x4, offset = 0x4, fixed_abs, tag = 'smem constant byte address 0x4 - core index']
  #allocation1 [shape = 'u32[144,128]{1,0:T(1,128)}', space=vmem, size = 0x12000, scoped, tag = 'internal scratch']
  %s0 = inlined_call_operand.vmem [shape: f32[2,800], index: 0, kind: input, shape index: {}]
  %s1 = inlined_call_operand.vmem [shape: bf16[800,400], index: 1, kind: input, shape index: {}]
  %s2 = inlined_call_operand.vmem [shape: f32[1,400], index: 2, kind: input, shape index: {}]
  %s3 = inlined_call_operand.vmem [shape: bf16[400,400], index: 3, kind: input, shape index: {}]
  %s4 = inlined_call_operand.vmem [shape: f32[1,400], index: 4, kind: input, shape index: {}]
  %s5 = inlined_call_operand.vmem [shape: bf16[400,22], index: 5, kind: input, shape index: {}]
  %s6 = inlined_call_operand.vmem [shape: f32[1,22], index: 6, kind: input, shape index: {}]
  %s7 = inlined_call_operand.hbm [shape: f32[2,22], index: 7, kind: output, shape index: {}]
  %s8 = sld [smem:[#allocation0]]
  $region38: #{tpu_custom_call.1} parent=0
    _
  %s10 = ssub.s32 1, %s8
  %s11 = scalar_select 0, %s10, %s8
  $region1: #{tpu_custom_call.1} parent=0
    #allocation2 [shape = 'u8[1024]{0}', space=vmem, size = 0x400, scoped, tag = 'output window, operand 0, single buffered']
    #allocation3 [shape = 's32[1]{0}', space=sflag, size = 0x4, scoped, tag = 'scoped memory for tpu_custom_call.1']
    %12 = vsyncpa [#allocation3], 0
    // Predicated region
    $region2: #{tpu_custom_call.1} parent=1 // pred_check
      _
    $region3: #{tpu_custom_call.1} parent=1 // pred_check_branch
      %14 = sbr.rel (0) target = $region5
    $region4: #{tpu_custom_call.1} parent=1 // pred_region
      _
    $region5: #{tpu_custom_call.1} parent=1 // pred_fallthru
      _
    // Predicated region
    $region6: #{tpu_custom_call.1} parent=1 // pred_check
      _
    $region7: #{tpu_custom_call.1} parent=1 // pred_check_branch
      %16 = sbr.rel (0) target = $region9
    $region8: #{tpu_custom_call.1} parent=1 // pred_region
      _
    $region9: #{tpu_custom_call.1} parent=1 // pred_fallthru
      _
    // Predicated region
    $region10: #{tpu_custom_call.1} parent=1 // pred_check
      _
    $region11: #{tpu_custom_call.1} parent=1 // pred_check_branch
      %18 = sbr.rel (0) target = $region13
    $region12: #{tpu_custom_call.1} parent=1 // pred_region
      _
    $region13: #{tpu_custom_call.1} parent=1 // pred_fallthru
      _
    // Predicated region
    $region14: #{tpu_custom_call.1} parent=1 // pred_check
      _
    $region15: #{tpu_custom_call.1} parent=1 // pred_check_branch
      %20 = sbr.rel (0) target = $region17
    $region16: #{tpu_custom_call.1} parent=1 // pred_region
      _
    $region17: #{tpu_custom_call.1} parent=1 // pred_fallthru
      _
    // Predicated region
    $region18: #{tpu_custom_call.1} parent=1 // pred_check
      _
    $region19: #{tpu_custom_call.1} parent=1 // pred_check_branch
      %22 = sbr.rel (0) target = $region21
    $region20: #{tpu_custom_call.1} parent=1 // pred_region
      _
    $region21: #{tpu_custom_call.1} parent=1 // pred_fallthru
      _
    // Predicated region
    $region22: #{tpu_custom_call.1} parent=1 // pred_check
      _
    $region23: #{tpu_custom_call.1} parent=1 // pred_check_branch
      %24 = sbr.rel (0) target = $region25
    $region24: #{tpu_custom_call.1} parent=1 // pred_region
      _
    $region25: #{tpu_custom_call.1} parent=1 // pred_fallthru
      _
    // Predicated region
    $region26: #{tpu_custom_call.1} parent=1 // pred_check
      _
    $region27: #{tpu_custom_call.1} parent=1 // pred_check_branch
      %26 = sbr.rel (0) target = $region29
    $region28: #{tpu_custom_call.1} parent=1 // pred_region
      _
    $region29: #{tpu_custom_call.1} parent=1 // pred_fallthru
      _
    %v28 = vld [vmem:[%s0] sm:$0xff]
    %v29 = vld [vmem:[%s0 + $0x8] sm:$0x3f]
    %v32 = vcombine.high %v28, %v28
    %v34 = vunpack.c.l.s4 1983009808
    %v35 = vunpack.c.0.s8 %v34
    %v36 = vlaneseq
    %v37 = vshrl.u32 %v36, 7
    %v38 = vsub.s32 %v35, %v37
    %v39 = vrot.slane %v28, %v38
    %v41 = vunpack.c.l.s4 1983009808
    %v42 = vunpack.c.0.s8 %v41
    %v43 = vlaneseq
    %v44 = vshrl.u32 %v43, 7
    %v45 = vsub.s32 %v42, %v44
    %v46 = vrot.slane %v32, %v45
    %v47 = vcombine.high %v39, %v39
    %v48 = vcombine.high %v46, %v46
    %v49 = vcombine.high %v29, %v29
    %v51 = vunpack.c.l.s4 1983009808
    %v52 = vunpack.c.0.s8 %v51
    %v53 = vlaneseq
    %v54 = vshrl.u32 %v53, 7
    %v55 = vsub.s32 %v52, %v54
    %v56 = vrot.slane %v29, %v55
    %v58 = vunpack.c.l.s4 1983009808
    %v59 = vunpack.c.0.s8 %v58
    %v60 = vlaneseq
    %v61 = vshrl.u32 %v60, 7
    %v62 = vsub.s32 %v59, %v61
    %v63 = vrot.slane %v49, %v62
    %v64 = vcombine.high %v56, %v56
    %v72 = vpack.c.bf16 %v39, %v39
    %v73 = vpack.c.bf16 %v47, %v47
    %v74 = vpack.c.bf16 %v46, %v46
    %v75 = vpack.c.bf16 %v48, %v48
    %v76 = vpack.c.bf16 %v56, %v56
    %v77 = vpack.c.bf16 %v64, %v64
    %v78 = vpack.c.bf16 %v63, %v63
    %v79 = vld [vmem:[%s1] sm:$0xff]
    %v80 = vld [vmem:[%s1 + $0x8] sm:$0xff]
    %v81 = vld [vmem:[%s1 + $0x10] sm:$0xff]
    %v82 = vld [vmem:[%s1 + $0x18] sm:$0xff]
    %v83 = vld [vmem:[%s1 + $0x20] sm:$0xff]
    %v84 = vld [vmem:[%s1 + $0x28] sm:$0xff]
    %v85 = vld [vmem:[%s1 + $0x30] sm:$0xff]
    %v86 = vld [vmem:[%s1 + $0x38] sm:$0xff]
    %v87 = vld [vmem:[%s1 + $0x40] sm:$0xff]
    %v88 = vld [vmem:[%s1 + $0x48] sm:$0xff]
    %v89 = vld [vmem:[%s1 + $0x50] sm:$0xff]
    %v90 = vld [vmem:[%s1 + $0x58] sm:$0xff]
    %v91 = vld [vmem:[%s1 + $0x60] sm:$0xff]
    %v92 = vld [vmem:[%s1 + $0x68] sm:$0xff]
    %v93 = vld [vmem:[%s1 + $0x70] sm:$0xff]
    %v94 = vld [vmem:[%s1 + $0x78] sm:$0xff]
    %v95 = vld [vmem:[%s1 + $0x80] sm:$0xff]
    %v96 = vld [vmem:[%s1 + $0x88] sm:$0xff]
    %v97 = vld [vmem:[%s1 + $0x90] sm:$0xff]
    %v98 = vld [vmem:[%s1 + $0x98] sm:$0xff]
    %v99 = vld [vmem:[%s1 + $0xa0] sm:$0xff]
    %v100 = vld [vmem:[%s1 + $0xa8] sm:$0xff]
    %v101 = vld [vmem:[%s1 + $0xb0] sm:$0xff]
    %v102 = vld [vmem:[%s1 + $0xb8] sm:$0xff]
    %v103 = vld [vmem:[%s1 + $0xc0] sm:$0xff]
    %v104 = vld [vmem:[%s1 + $0xc8] sm:$0xff]
    %v105 = vld [vmem:[%s1 + $0xd0] sm:$0xff]
    %v106 = vld [vmem:[%s1 + $0xd8] sm:$0xff]
    %v107 = vld [vmem:[%s1 + $0xe0] sm:$0xff]
    %v108 = vld [vmem:[%s1 + $0xe8] sm:$0xff]
    %v109 = vld [vmem:[%s1 + $0xf0] sm:$0xff]
    %v110 = vld [vmem:[%s1 + $0xf8] sm:$0xff]
    %v111 = vld [vmem:[%s1 + $0x100] sm:$0xff]
    %v112 = vld [vmem:[%s1 + $0x108] sm:$0xff]
    %v113 = vld [vmem:[%s1 + $0x110] sm:$0xff]
    %v114 = vld [vmem:[%s1 + $0x118] sm:$0xff]
    %v115 = vld [vmem:[%s1 + $0x120] sm:$0xff]
    %v116 = vld [vmem:[%s1 + $0x128] sm:$0xff]
    %v117 = vld [vmem:[%s1 + $0x130] sm:$0xff]
    %v118 = vld [vmem:[%s1 + $0x138] sm:$0xff]
    %v119 = vld [vmem:[%s1 + $0x140] sm:$0xff]
    %v120 = vld [vmem:[%s1 + $0x148] sm:$0xff]
    %v121 = vld [vmem:[%s1 + $0x150] sm:$0xff]
    %v122 = vld [vmem:[%s1 + $0x158] sm:$0xff]
    %v123 = vld [vmem:[%s1 + $0x160] sm:$0xff]
    %v124 = vld [vmem:[%s1 + $0x168] sm:$0xff]
    %v125 = vld [vmem:[%s1 + $0x170] sm:$0xff]
    %v126 = vld [vmem:[%s1 + $0x178] sm:$0xff]
    %v127 = vld [vmem:[%s1 + $0x180] sm:$0xff]
    %v128 = vld [vmem:[%s1 + $0x188] sm:$0xff]
    %v129 = vld [vmem:[%s1 + $0x190] sm:$0xff]
    %v130 = vld [vmem:[%s1 + $0x198] sm:$0xff]
    %v131 = vld [vmem:[%s1 + $0x1a0] sm:$0xff]
    %v132 = vld [vmem:[%s1 + $0x1a8] sm:$0xff]
    %v133 = vld [vmem:[%s1 + $0x1b0] sm:$0xff]
    %v134 = vld [vmem:[%s1 + $0x1b8] sm:$0xff]
    %v135 = vld [vmem:[%s1 + $0x1c0] sm:$0xff]
    %v136 = vld [vmem:[%s1 + $0x1c8] sm:$0xff]
    %v137 = vld [vmem:[%s1 + $0x1d0] sm:$0xff]
    %v138 = vld [vmem:[%s1 + $0x1d8] sm:$0xff]
    %v139 = vld [vmem:[%s1 + $0x1e0] sm:$0xff]
    %v140 = vld [vmem:[%s1 + $0x1e8] sm:$0xff]
    %v141 = vld [vmem:[%s1 + $0x1f0] sm:$0xff]
    %v142 = vld [vmem:[%s1 + $0x1f8] sm:$0xff]
    %v143 = vld [vmem:[%s1 + $0x200] sm:$0xff]
    %v144 = vld [vmem:[%s1 + $0x208] sm:$0xff]
    %v145 = vld [vmem:[%s1 + $0x210] sm:$0xff]
    %v146 = vld [vmem:[%s1 + $0x218] sm:$0xff]
    %v147 = vld [vmem:[%s1 + $0x220] sm:$0xff]
    %v148 = vld [vmem:[%s1 + $0x228] sm:$0xff]
    %v149 = vld [vmem:[%s1 + $0x230] sm:$0xff]
    %v150 = vld [vmem:[%s1 + $0x238] sm:$0xff]
    %v151 = vld [vmem:[%s1 + $0x240] sm:$0xff]
    %v152 = vld [vmem:[%s1 + $0x248] sm:$0xff]
    %v153 = vld [vmem:[%s1 + $0x250] sm:$0xff]
    %v154 = vld [vmem:[%s1 + $0x258] sm:$0xff]
    %v155 = vld [vmem:[%s1 + $0x260] sm:$0xff]
    %v156 = vld [vmem:[%s1 + $0x268] sm:$0xff]
    %v157 = vld [vmem:[%s1 + $0x270] sm:$0xff]
    %v158 = vld [vmem:[%s1 + $0x278] sm:$0xff]
    %v159 = vld [vmem:[%s1 + $0x280] sm:$0xff]
    %v160 = vld [vmem:[%s1 + $0x288] sm:$0xff]
    %v161 = vld [vmem:[%s1 + $0x290] sm:$0xff]
    %v162 = vld [vmem:[%s1 + $0x298] sm:$0xff]
    %v163 = vld [vmem:[%s1 + $0x2a0] sm:$0xff]
    %v164 = vld [vmem:[%s1 + $0x2a8] sm:$0xff]
    %v165 = vld [vmem:[%s1 + $0x2b0] sm:$0xff]
    %v166 = vld [vmem:[%s1 + $0x2b8] sm:$0xff]
    %v167 = vld [vmem:[%s1 + $0x2c0] sm:$0xff]
    %v168 = vld [vmem:[%s1 + $0x2c8] sm:$0xff]
    %v169 = vld [vmem:[%s1 + $0x2d0] sm:$0xff]
    %v170 = vld [vmem:[%s1 + $0x2d8] sm:$0xff]
    %v171 = vld [vmem:[%s1 + $0x2e0] sm:$0xff]
    %v172 = vld [vmem:[%s1 + $0x2e8] sm:$0xff]
    %v173 = vld [vmem:[%s1 + $0x2f0] sm:$0xff]
    %v174 = vld [vmem:[%s1 + $0x2f8] sm:$0xff]
    %v175 = vld [vmem:[%s1 + $0x300] sm:$0xff]
    %v176 = vld [vmem:[%s1 + $0x308] sm:$0xff]
    %v177 = vld [vmem:[%s1 + $0x310] sm:$0xff]
    %v178 = vld [vmem:[%s1 + $0x318] sm:$0xff]
    %v179 = vld [vmem:[%s1 + $0x320] sm:$0xff]
    %v180 = vld [vmem:[%s1 + $0x328] sm:$0xff]
    %v181 = vld [vmem:[%s1 + $0x330] sm:$0xff]
    %v182 = vld [vmem:[%s1 + $0x338] sm:$0xff]
    %v183 = vld [vmem:[%s1 + $0x340] sm:$0xff]
    %v184 = vld [vmem:[%s1 + $0x348] sm:$0xff]
    %v185 = vld [vmem:[%s1 + $0x350] sm:$0xff]
    %v186 = vld [vmem:[%s1 + $0x358] sm:$0xff]
    %v187 = vld [vmem:[%s1 + $0x360] sm:$0xff]
    %v188 = vld [vmem:[%s1 + $0x368] sm:$0xff]
    %v189 = vld [vmem:[%s1 + $0x370] sm:$0xff]
    %v190 = vld [vmem:[%s1 + $0x378] sm:$0xff]
    %v191 = vld [vmem:[%s1 + $0x380] sm:$0xff]
    %v192 = vld [vmem:[%s1 + $0x388] sm:$0xff]
    %v193 = vld [vmem:[%s1 + $0x390] sm:$0xff]
    %v194 = vld [vmem:[%s1 + $0x398] sm:$0xff]
    %v195 = vld [vmem:[%s1 + $0x3a0] sm:$0xff]
    %v196 = vld [vmem:[%s1 + $0x3a8] sm:$0xff]
    %v197 = vld [vmem:[%s1 + $0x3b0] sm:$0xff]
    %v198 = vld [vmem:[%s1 + $0x3b8] sm:$0xff]
    %v199 = vld [vmem:[%s1 + $0x3c0] sm:$0xff]
    %v200 = vld [vmem:[%s1 + $0x3c8] sm:$0xff]
    %v201 = vld [vmem:[%s1 + $0x3d0] sm:$0xff]
    %v202 = vld [vmem:[%s1 + $0x3d8] sm:$0xff]
    %v203 = vld [vmem:[%s1 + $0x3e0] sm:$0xff]
    %v204 = vld [vmem:[%s1 + $0x3e8] sm:$0xff]
    %v205 = vld [vmem:[%s1 + $0x3f0] sm:$0xff]
    %v206 = vld [vmem:[%s1 + $0x3f8] sm:$0xff]
    %v207 = vld [vmem:[%s1 + $0x400] sm:$0xff]
    %v208 = vld [vmem:[%s1 + $0x408] sm:$0xff]
    %v209 = vld [vmem:[%s1 + $0x410] sm:$0xff]
    %v210 = vld [vmem:[%s1 + $0x418] sm:$0xff]
    %v211 = vld [vmem:[%s1 + $0x420] sm:$0xff]
    %v212 = vld [vmem:[%s1 + $0x428] sm:$0xff]
    %v213 = vld [vmem:[%s1 + $0x430] sm:$0xff]
    %v214 = vld [vmem:[%s1 + $0x438] sm:$0xff]
    %v215 = vld [vmem:[%s1 + $0x440] sm:$0xff]
    %v216 = vld [vmem:[%s1 + $0x448] sm:$0xff]
    %v217 = vld [vmem:[%s1 + $0x450] sm:$0xff]
    %v218 = vld [vmem:[%s1 + $0x458] sm:$0xff]
    %v219 = vld [vmem:[%s1 + $0x460] sm:$0xff]
    %v220 = vld [vmem:[%s1 + $0x468] sm:$0xff]
    %v221 = vld [vmem:[%s1 + $0x470] sm:$0xff]
    %v222 = vld [vmem:[%s1 + $0x478] sm:$0xff]
    %v223 = vld [vmem:[%s1 + $0x480] sm:$0xff]
    %v224 = vld [vmem:[%s1 + $0x488] sm:$0xff]
    %v225 = vld [vmem:[%s1 + $0x490] sm:$0xff]
    %v226 = vld [vmem:[%s1 + $0x498] sm:$0xff]
    %v227 = vld [vmem:[%s1 + $0x4a0] sm:$0xff]
    %v228 = vld [vmem:[%s1 + $0x4a8] sm:$0xff]
    %v229 = vld [vmem:[%s1 + $0x4b0] sm:$0xff]
    %v230 = vld [vmem:[%s1 + $0x4b8] sm:$0xff]
    %v231 = vld [vmem:[%s1 + $0x4c0] sm:$0xff]
    %v232 = vld [vmem:[%s1 + $0x4c8] sm:$0xff]
    %v233 = vld [vmem:[%s1 + $0x4d0] sm:$0xff]
    %v234 = vld [vmem:[%s1 + $0x4d8] sm:$0xff]
    %v235 = vld [vmem:[%s1 + $0x4e0] sm:$0xff]
    %v236 = vld [vmem:[%s1 + $0x4e8] sm:$0xff]
    %v237 = vld [vmem:[%s1 + $0x4f0] sm:$0xff]
    %v238 = vld [vmem:[%s1 + $0x4f8] sm:$0xff]
    %v239 = vld [vmem:[%s1 + $0x500] sm:$0xff]
    %v240 = vld [vmem:[%s1 + $0x508] sm:$0xff]
    %v241 = vld [vmem:[%s1 + $0x510] sm:$0xff]
    %v242 = vld [vmem:[%s1 + $0x518] sm:$0xff]
    %v243 = vld [vmem:[%s1 + $0x520] sm:$0xff]
    %v244 = vld [vmem:[%s1 + $0x528] sm:$0xff]
    %v245 = vld [vmem:[%s1 + $0x530] sm:$0xff]
    %v246 = vld [vmem:[%s1 + $0x538] sm:$0xff]
    %v247 = vld [vmem:[%s1 + $0x540] sm:$0xff]
    %v248 = vld [vmem:[%s1 + $0x548] sm:$0xff]
    %v249 = vld [vmem:[%s1 + $0x550] sm:$0xff]
    %v250 = vld [vmem:[%s1 + $0x558] sm:$0xff]
    %v251 = vld [vmem:[%s1 + $0x560] sm:$0xff]
    %v252 = vld [vmem:[%s1 + $0x568] sm:$0xff]
    %v253 = vld [vmem:[%s1 + $0x570] sm:$0xff]
    %v254 = vld [vmem:[%s1 + $0x578] sm:$0xff]
    %v255 = vld [vmem:[%s1 + $0x580] sm:$0xff]
    %v256 = vld [vmem:[%s1 + $0x588] sm:$0xff]
    %v257 = vld [vmem:[%s1 + $0x590] sm:$0xff]
    %v258 = vld [vmem:[%s1 + $0x598] sm:$0xff]
    %v259 = vld [vmem:[%s1 + $0x5a0] sm:$0xff]
    %v260 = vld [vmem:[%s1 + $0x5a8] sm:$0xff]
    %v261 = vld [vmem:[%s1 + $0x5b0] sm:$0xff]
    %v262 = vld [vmem:[%s1 + $0x5b8] sm:$0xff]
    %v263 = vld [vmem:[%s1 + $0x5c0] sm:$0xff]
    %v264 = vld [vmem:[%s1 + $0x5c8] sm:$0xff]
    %v265 = vld [vmem:[%s1 + $0x5d0] sm:$0xff]
    %v266 = vld [vmem:[%s1 + $0x5d8] sm:$0xff]
    %v267 = vld [vmem:[%s1 + $0x5e0] sm:$0xff]
    %v268 = vld [vmem:[%s1 + $0x5e8] sm:$0xff]
    %v269 = vld [vmem:[%s1 + $0x5f0] sm:$0xff]
    %v270 = vld [vmem:[%s1 + $0x5f8] sm:$0xff]
    %v271 = vld [vmem:[%s1 + $0x600] sm:$0xff]
    %v272 = vld [vmem:[%s1 + $0x608] sm:$0xff]
    %v273 = vld [vmem:[%s1 + $0x610] sm:$0xff]
    %v274 = vld [vmem:[%s1 + $0x618] sm:$0xff]
    %v275 = vld [vmem:[%s1 + $0x620] sm:$0xff]
    %v276 = vld [vmem:[%s1 + $0x628] sm:$0xff]
    %v277 = vld [vmem:[%s1 + $0x630] sm:$0xff]
    %v278 = vld [vmem:[%s1 + $0x638] sm:$0xff]
    %v279 = vld [vmem:[%s2] sm:$0xf]
    %v281 = vlaneseq
    %v282 = vshrl.u32 %v281, 7
    %v283 = vsub.s32 0, %v282
    %v284 = vrot.slane %v279, %v283
    %v285 = vlaneseq
    %v286 = vshrl.u32 %v285, 7
    %v287 = vsub.s32 1, %v286
    %v288 = vrot.slane %v279, %v287
    %v289 = vlaneseq
    %v290 = vshrl.u32 %v289, 7
    %v291 = vsub.s32 2, %v290
    %v292 = vrot.slane %v279, %v291
    %v293 = vlaneseq
    %v294 = vshrl.u32 %v293, 7
    %v295 = vsub.s32 3, %v294
    %v296 = vrot.slane %v279, %v295
    %v501 = vunpack.c.l.b16 %v79
    %v502 = vunpack.c.h.b16 %v79
    %v503 = vunpack.c.l.b16 %v80
    %v504 = vunpack.c.h.b16 %v80
    %v505 = vunpack.c.l.b16 %v81
    %v506 = vunpack.c.h.b16 %v81
    %v507 = vunpack.c.l.b16 %v82
    %v508 = vunpack.c.h.b16 %v82
    %v509 = vunpack.c.l.b16 %v83
    %v510 = vunpack.c.h.b16 %v83
    %v511 = vunpack.c.l.b16 %v84
    %v512 = vunpack.c.h.b16 %v84
    %v513 = vunpack.c.l.b16 %v85
    %v514 = vunpack.c.h.b16 %v85
    %v515 = vunpack.c.l.b16 %v86
    %v516 = vunpack.c.h.b16 %v86
    %v517 = vunpack.c.l.b16 %v87
    %v518 = vunpack.c.h.b16 %v87
    %v519 = vunpack.c.l.b16 %v88
    %v520 = vunpack.c.h.b16 %v88
    %v521 = vunpack.c.l.b16 %v89
    %v522 = vunpack.c.h.b16 %v89
    %v523 = vunpack.c.l.b16 %v90
    %v524 = vunpack.c.h.b16 %v90
    %v525 = vunpack.c.l.b16 %v91
    %v526 = vunpack.c.h.b16 %v91
    %v527 = vunpack.c.l.b16 %v92
    %v528 = vunpack.c.h.b16 %v92
    %v529 = vunpack.c.l.b16 %v93
    %v530 = vunpack.c.h.b16 %v93
    %v531 = vunpack.c.l.b16 %v94
    %v532 = vunpack.c.h.b16 %v94
    %v533 = vunpack.c.l.b16 %v95
    %v534 = vunpack.c.h.b16 %v95
    %v535 = vunpack.c.l.b16 %v96
    %v536 = vunpack.c.h.b16 %v96
    %v537 = vunpack.c.l.b16 %v97
    %v538 = vunpack.c.h.b16 %v97
    %v539 = vunpack.c.l.b16 %v98
    %v540 = vunpack.c.h.b16 %v98
    %v541 = vunpack.c.l.b16 %v99
    %v542 = vunpack.c.h.b16 %v99
    %v543 = vunpack.c.l.b16 %v100
    %v544 = vunpack.c.h.b16 %v100
    %v545 = vunpack.c.l.b16 %v101
    %v546 = vunpack.c.h.b16 %v101
    %v547 = vunpack.c.l.b16 %v102
    %v548 = vunpack.c.h.b16 %v102
    %v549 = vunpack.c.l.b16 %v103
    %v550 = vunpack.c.h.b16 %v103
    %v551 = vunpack.c.l.b16 %v104
    %v552 = vunpack.c.h.b16 %v104
    %v553 = vunpack.c.l.b16 %v105
    %v554 = vunpack.c.h.b16 %v105
    %v555 = vunpack.c.l.b16 %v106
    %v556 = vunpack.c.h.b16 %v106
    %v557 = vunpack.c.l.b16 %v107
    %v558 = vunpack.c.h.b16 %v107
    %v559 = vunpack.c.l.b16 %v108
    %v560 = vunpack.c.h.b16 %v108
    %v561 = vunpack.c.l.b16 %v109
    %v562 = vunpack.c.h.b16 %v109
    %v563 = vunpack.c.l.b16 %v110
    %v564 = vunpack.c.h.b16 %v110
    %v565 = vunpack.c.l.b16 %v111
    %v566 = vunpack.c.h.b16 %v111
    %v567 = vunpack.c.l.b16 %v112
    %v568 = vunpack.c.h.b16 %v112
    %v569 = vunpack.c.l.b16 %v113
    %v570 = vunpack.c.h.b16 %v113
    %v571 = vunpack.c.l.b16 %v114
    %v572 = vunpack.c.h.b16 %v114
    %v573 = vunpack.c.l.b16 %v115
    %v574 = vunpack.c.h.b16 %v115
    %v575 = vunpack.c.l.b16 %v116
    %v576 = vunpack.c.h.b16 %v116
    %v577 = vunpack.c.l.b16 %v117
    %v578 = vunpack.c.h.b16 %v117
    %v579 = vunpack.c.l.b16 %v118
    %v580 = vunpack.c.h.b16 %v118
    %v581 = vunpack.c.l.b16 %v119
    %v582 = vunpack.c.h.b16 %v119
    %v583 = vunpack.c.l.b16 %v120
    %v584 = vunpack.c.h.b16 %v120
    %v585 = vunpack.c.l.b16 %v121
    %v586 = vunpack.c.h.b16 %v121
    %v587 = vunpack.c.l.b16 %v122
    %v588 = vunpack.c.h.b16 %v122
    %v589 = vunpack.c.l.b16 %v123
    %v590 = vunpack.c.h.b16 %v123
    %v591 = vunpack.c.l.b16 %v124
    %v592 = vunpack.c.h.b16 %v124
    %v593 = vunpack.c.l.b16 %v125
    %v594 = vunpack.c.h.b16 %v125
    %v595 = vunpack.c.l.b16 %v126
    %v596 = vunpack.c.h.b16 %v126
    %v597 = vunpack.c.l.b16 %v127
    %v598 = vunpack.c.h.b16 %v127
    %v599 = vunpack.c.l.b16 %v128
    %v600 = vunpack.c.h.b16 %v128
    %v601 = vunpack.c.l.b16 %v129
    %v602 = vunpack.c.h.b16 %v129
    %v603 = vunpack.c.l.b16 %v130
    %v604 = vunpack.c.h.b16 %v130
    %v605 = vunpack.c.l.b16 %v131
    %v606 = vunpack.c.h.b16 %v131
    %v607 = vunpack.c.l.b16 %v132
    %v608 = vunpack.c.h.b16 %v132
    %v609 = vunpack.c.l.b16 %v133
    %v610 = vunpack.c.h.b16 %v133
    %v611 = vunpack.c.l.b16 %v134
    %v612 = vunpack.c.h.b16 %v134
    %v613 = vunpack.c.l.b16 %v135
    %v614 = vunpack.c.h.b16 %v135
    %v615 = vunpack.c.l.b16 %v136
    %v616 = vunpack.c.h.b16 %v136
    %v617 = vunpack.c.l.b16 %v137
    %v618 = vunpack.c.h.b16 %v137
    %v619 = vunpack.c.l.b16 %v138
    %v620 = vunpack.c.h.b16 %v138
    %v621 = vunpack.c.l.b16 %v139
    %v622 = vunpack.c.h.b16 %v139
    %v623 = vunpack.c.l.b16 %v140
    %v624 = vunpack.c.h.b16 %v140
    %v625 = vunpack.c.l.b16 %v141
    %v626 = vunpack.c.h.b16 %v141
    %v627 = vunpack.c.l.b16 %v142
    %v628 = vunpack.c.h.b16 %v142
    %v629 = vunpack.c.l.b16 %v143
    %v630 = vunpack.c.h.b16 %v143
    %v631 = vunpack.c.l.b16 %v144
    %v632 = vunpack.c.h.b16 %v144
    %v633 = vunpack.c.l.b16 %v145
    %v634 = vunpack.c.h.b16 %v145
    %v635 = vunpack.c.l.b16 %v146
    %v636 = vunpack.c.h.b16 %v146
    %v637 = vunpack.c.l.b16 %v147
    %v638 = vunpack.c.h.b16 %v147
    %v639 = vunpack.c.l.b16 %v148
    %v640 = vunpack.c.h.b16 %v148
    %v641 = vunpack.c.l.b16 %v149
    %v642 = vunpack.c.h.b16 %v149
    %v643 = vunpack.c.l.b16 %v150
    %v644 = vunpack.c.h.b16 %v150
    %v645 = vunpack.c.l.b16 %v151
    %v646 = vunpack.c.h.b16 %v151
    %v647 = vunpack.c.l.b16 %v152
    %v648 = vunpack.c.h.b16 %v152
    %v649 = vunpack.c.l.b16 %v153
    %v650 = vunpack.c.h.b16 %v153
    %v651 = vunpack.c.l.b16 %v154
    %v652 = vunpack.c.h.b16 %v154
    %v653 = vunpack.c.l.b16 %v155
    %v654 = vunpack.c.h.b16 %v155
    %v655 = vunpack.c.l.b16 %v156
    %v656 = vunpack.c.h.b16 %v156
    %v657 = vunpack.c.l.b16 %v157
    %v658 = vunpack.c.h.b16 %v157
    %v659 = vunpack.c.l.b16 %v158
    %v660 = vunpack.c.h.b16 %v158
    %v661 = vunpack.c.l.b16 %v159
    %v662 = vunpack.c.h.b16 %v159
    %v663 = vunpack.c.l.b16 %v160
    %v664 = vunpack.c.h.b16 %v160
    %v665 = vunpack.c.l.b16 %v161
    %v666 = vunpack.c.h.b16 %v161
    %v667 = vunpack.c.l.b16 %v162
    %v668 = vunpack.c.h.b16 %v162
    %v669 = vunpack.c.l.b16 %v163
    %v670 = vunpack.c.h.b16 %v163
    %v671 = vunpack.c.l.b16 %v164
    %v672 = vunpack.c.h.b16 %v164
    %v673 = vunpack.c.l.b16 %v165
    %v674 = vunpack.c.h.b16 %v165
    %v675 = vunpack.c.l.b16 %v166
    %v676 = vunpack.c.h.b16 %v166
    %v677 = vunpack.c.l.b16 %v167
    %v678 = vunpack.c.h.b16 %v167
    %v679 = vunpack.c.l.b16 %v168
    %v680 = vunpack.c.h.b16 %v168
    %v681 = vunpack.c.l.b16 %v169
    %v682 = vunpack.c.h.b16 %v169
    %v683 = vunpack.c.l.b16 %v170
    %v684 = vunpack.c.h.b16 %v170
    %v685 = vunpack.c.l.b16 %v171
    %v686 = vunpack.c.h.b16 %v171
    %v687 = vunpack.c.l.b16 %v172
    %v688 = vunpack.c.h.b16 %v172
    %v689 = vunpack.c.l.b16 %v173
    %v690 = vunpack.c.h.b16 %v173
    %v691 = vunpack.c.l.b16 %v174
    %v692 = vunpack.c.h.b16 %v174
    %v693 = vunpack.c.l.b16 %v175
    %v694 = vunpack.c.h.b16 %v175
    %v695 = vunpack.c.l.b16 %v176
    %v696 = vunpack.c.h.b16 %v176
    %v697 = vunpack.c.l.b16 %v177
    %v698 = vunpack.c.h.b16 %v177
    %v699 = vunpack.c.l.b16 %v178
    %v700 = vunpack.c.h.b16 %v178
    %v701 = vunpack.c.l.b16 %v179
    %v702 = vunpack.c.h.b16 %v179
    %v703 = vunpack.c.l.b16 %v180
    %v704 = vunpack.c.h.b16 %v180
    %v705 = vunpack.c.l.b16 %v181
    %v706 = vunpack.c.h.b16 %v181
    %v707 = vunpack.c.l.b16 %v182
    %v708 = vunpack.c.h.b16 %v182
    %v709 = vunpack.c.l.b16 %v183
    %v710 = vunpack.c.h.b16 %v183
    %v711 = vunpack.c.l.b16 %v184
    %v712 = vunpack.c.h.b16 %v184
    %v713 = vunpack.c.l.b16 %v185
    %v714 = vunpack.c.h.b16 %v185
    %v715 = vunpack.c.l.b16 %v186
    %v716 = vunpack.c.h.b16 %v186
    %v717 = vunpack.c.l.b16 %v187
    %v718 = vunpack.c.h.b16 %v187
    %v719 = vunpack.c.l.b16 %v188
    %v720 = vunpack.c.h.b16 %v188
    %v721 = vunpack.c.l.b16 %v189
    %v722 = vunpack.c.h.b16 %v189
    %v723 = vunpack.c.l.b16 %v190
    %v724 = vunpack.c.h.b16 %v190
    %v725 = vunpack.c.l.b16 %v191
    %v726 = vunpack.c.h.b16 %v191
    %v727 = vunpack.c.l.b16 %v192
    %v728 = vunpack.c.h.b16 %v192
    %v729 = vunpack.c.l.b16 %v193
    %v730 = vunpack.c.h.b16 %v193
    %v731 = vunpack.c.l.b16 %v194
    %v732 = vunpack.c.h.b16 %v194
    %v733 = vunpack.c.l.b16 %v195
    %v734 = vunpack.c.h.b16 %v195
    %v735 = vunpack.c.l.b16 %v196
    %v736 = vunpack.c.h.b16 %v196
    %v737 = vunpack.c.l.b16 %v197
    %v738 = vunpack.c.h.b16 %v197
    %v739 = vunpack.c.l.b16 %v198
    %v740 = vunpack.c.h.b16 %v198
    %v741 = vunpack.c.l.b16 %v199
    %v742 = vunpack.c.h.b16 %v199
    %v743 = vunpack.c.l.b16 %v200
    %v744 = vunpack.c.h.b16 %v200
    %v745 = vunpack.c.l.b16 %v201
    %v746 = vunpack.c.h.b16 %v201
    %v747 = vunpack.c.l.b16 %v202
    %v748 = vunpack.c.h.b16 %v202
    %v749 = vunpack.c.l.b16 %v203
    %v750 = vunpack.c.h.b16 %v203
    %v751 = vunpack.c.l.b16 %v204
    %v752 = vunpack.c.h.b16 %v204
    %v753 = vunpack.c.l.b16 %v205
    %v754 = vunpack.c.h.b16 %v205
    %v755 = vunpack.c.l.b16 %v206
    %v756 = vunpack.c.h.b16 %v206
    %v757 = vunpack.c.l.b16 %v207
    %v758 = vunpack.c.h.b16 %v207
    %v759 = vunpack.c.l.b16 %v208
    %v760 = vunpack.c.h.b16 %v208
    %v761 = vunpack.c.l.b16 %v209
    %v762 = vunpack.c.h.b16 %v209
    %v763 = vunpack.c.l.b16 %v210
    %v764 = vunpack.c.h.b16 %v210
    %v765 = vunpack.c.l.b16 %v211
    %v766 = vunpack.c.h.b16 %v211
    %v767 = vunpack.c.l.b16 %v212
    %v768 = vunpack.c.h.b16 %v212
    %v769 = vunpack.c.l.b16 %v213
    %v770 = vunpack.c.h.b16 %v213
    %v771 = vunpack.c.l.b16 %v214
    %v772 = vunpack.c.h.b16 %v214
    %v773 = vunpack.c.l.b16 %v215
    %v774 = vunpack.c.h.b16 %v215
    %v775 = vunpack.c.l.b16 %v216
    %v776 = vunpack.c.h.b16 %v216
    %v777 = vunpack.c.l.b16 %v217
    %v778 = vunpack.c.h.b16 %v217
    %v779 = vunpack.c.l.b16 %v218
    %v780 = vunpack.c.h.b16 %v218
    %v781 = vunpack.c.l.b16 %v219
    %v782 = vunpack.c.h.b16 %v219
    %v783 = vunpack.c.l.b16 %v220
    %v784 = vunpack.c.h.b16 %v220
    %v785 = vunpack.c.l.b16 %v221
    %v786 = vunpack.c.h.b16 %v221
    %v787 = vunpack.c.l.b16 %v222
    %v788 = vunpack.c.h.b16 %v222
    %v789 = vunpack.c.l.b16 %v223
    %v790 = vunpack.c.h.b16 %v223
    %v791 = vunpack.c.l.b16 %v224
    %v792 = vunpack.c.h.b16 %v224
    %v793 = vunpack.c.l.b16 %v225
    %v794 = vunpack.c.h.b16 %v225
    %v795 = vunpack.c.l.b16 %v226
    %v796 = vunpack.c.h.b16 %v226
    %v797 = vunpack.c.l.b16 %v227
    %v798 = vunpack.c.h.b16 %v227
    %v799 = vunpack.c.l.b16 %v228
    %v800 = vunpack.c.h.b16 %v228
    %v801 = vunpack.c.l.b16 %v229
    %v802 = vunpack.c.h.b16 %v229
    %v803 = vunpack.c.l.b16 %v230
    %v804 = vunpack.c.h.b16 %v230
    %v805 = vunpack.c.l.b16 %v231
    %v806 = vunpack.c.h.b16 %v231
    %v807 = vunpack.c.l.b16 %v232
    %v808 = vunpack.c.h.b16 %v232
    %v809 = vunpack.c.l.b16 %v233
    %v810 = vunpack.c.h.b16 %v233
    %v811 = vunpack.c.l.b16 %v234
    %v812 = vunpack.c.h.b16 %v234
    %v813 = vunpack.c.l.b16 %v235
    %v814 = vunpack.c.h.b16 %v235
    %v815 = vunpack.c.l.b16 %v236
    %v816 = vunpack.c.h.b16 %v236
    %v817 = vunpack.c.l.b16 %v237
    %v818 = vunpack.c.h.b16 %v237
    %v819 = vunpack.c.l.b16 %v238
    %v820 = vunpack.c.h.b16 %v238
    %v821 = vunpack.c.l.b16 %v239
    %v822 = vunpack.c.h.b16 %v239
    %v823 = vunpack.c.l.b16 %v240
    %v824 = vunpack.c.h.b16 %v240
    %v825 = vunpack.c.l.b16 %v241
    %v826 = vunpack.c.h.b16 %v241
    %v827 = vunpack.c.l.b16 %v242
    %v828 = vunpack.c.h.b16 %v242
    %v829 = vunpack.c.l.b16 %v243
    %v830 = vunpack.c.h.b16 %v243
    %v831 = vunpack.c.l.b16 %v244
    %v832 = vunpack.c.h.b16 %v244
    %v833 = vunpack.c.l.b16 %v245
    %v834 = vunpack.c.h.b16 %v245
    %v835 = vunpack.c.l.b16 %v246
    %v836 = vunpack.c.h.b16 %v246
    %v837 = vunpack.c.l.b16 %v247
    %v838 = vunpack.c.h.b16 %v247
    %v839 = vunpack.c.l.b16 %v248
    %v840 = vunpack.c.h.b16 %v248
    %v841 = vunpack.c.l.b16 %v249
    %v842 = vunpack.c.h.b16 %v249
    %v843 = vunpack.c.l.b16 %v250
    %v844 = vunpack.c.h.b16 %v250
    %v845 = vunpack.c.l.b16 %v251
    %v846 = vunpack.c.h.b16 %v251
    %v847 = vunpack.c.l.b16 %v252
    %v848 = vunpack.c.h.b16 %v252
    %v849 = vunpack.c.l.b16 %v253
    %v850 = vunpack.c.h.b16 %v253
    %v851 = vunpack.c.l.b16 %v254
    %v852 = vunpack.c.h.b16 %v254
    %v853 = vunpack.c.l.b16 %v255
    %v854 = vunpack.c.h.b16 %v255
    %v855 = vunpack.c.l.b16 %v256
    %v856 = vunpack.c.h.b16 %v256
    %v857 = vunpack.c.l.b16 %v257
    %v858 = vunpack.c.h.b16 %v257
    %v859 = vunpack.c.l.b16 %v258
    %v860 = vunpack.c.h.b16 %v258
    %v861 = vunpack.c.l.b16 %v259
    %v862 = vunpack.c.h.b16 %v259
    %v863 = vunpack.c.l.b16 %v260
    %v864 = vunpack.c.h.b16 %v260
    %v865 = vunpack.c.l.b16 %v261
    %v866 = vunpack.c.h.b16 %v261
    %v867 = vunpack.c.l.b16 %v262
    %v868 = vunpack.c.h.b16 %v262
    %v869 = vunpack.c.l.b16 %v263
    %v870 = vunpack.c.h.b16 %v263
    %v871 = vunpack.c.l.b16 %v264
    %v872 = vunpack.c.h.b16 %v264
    %v873 = vunpack.c.l.b16 %v265
    %v874 = vunpack.c.h.b16 %v265
    %v875 = vunpack.c.l.b16 %v266
    %v876 = vunpack.c.h.b16 %v266
    %v877 = vunpack.c.l.b16 %v267
    %v878 = vunpack.c.h.b16 %v267
    %v879 = vunpack.c.l.b16 %v268
    %v880 = vunpack.c.h.b16 %v268
    %v881 = vunpack.c.l.b16 %v269
    %v882 = vunpack.c.h.b16 %v269
    %v883 = vunpack.c.l.b16 %v270
    %v884 = vunpack.c.h.b16 %v270
    %v885 = vunpack.c.l.b16 %v271
    %v886 = vunpack.c.h.b16 %v271
    %v887 = vunpack.c.l.b16 %v272
    %v888 = vunpack.c.h.b16 %v272
    %v889 = vunpack.c.l.b16 %v273
    %v890 = vunpack.c.h.b16 %v273
    %v891 = vunpack.c.l.b16 %v274
    %v892 = vunpack.c.h.b16 %v274
    %v893 = vunpack.c.l.b16 %v275
    %v894 = vunpack.c.h.b16 %v275
    %v895 = vunpack.c.l.b16 %v276
    %v896 = vunpack.c.h.b16 %v276
    %v897 = vunpack.c.l.b16 %v277
    %v898 = vunpack.c.h.b16 %v277
    %v899 = vunpack.c.l.b16 %v278
    %v900 = vunpack.c.h.b16 %v278
    %v901 = vpack.c.b16 %v505, %v501
    %v902 = vpack.c.b16 %v506, %v502
    %v903 = vpack.c.b16 %v507, %v503
    %v904 = vpack.c.b16 %v508, %v504
    %v905 = vpack.c.b16 %v513, %v509
    %v906 = vpack.c.b16 %v514, %v510
    %v907 = vpack.c.b16 %v515, %v511
    %v908 = vpack.c.b16 %v516, %v512
    %v909 = vpack.c.b16 %v521, %v517
    %v910 = vpack.c.b16 %v522, %v518
    %v911 = vpack.c.b16 %v523, %v519
    %v912 = vpack.c.b16 %v524, %v520
    %v913 = vpack.c.b16 %v529, %v525
    %v914 = vpack.c.b16 %v530, %v526
    %v915 = vpack.c.b16 %v531, %v527
    %v916 = vpack.c.b16 %v532, %v528
    %v917 = vpack.c.b16 %v537, %v533
    %v918 = vpack.c.b16 %v538, %v534
    %v919 = vpack.c.b16 %v539, %v535
    %v920 = vpack.c.b16 %v540, %v536
    %v921 = vpack.c.b16 %v545, %v541
    %v922 = vpack.c.b16 %v546, %v542
    %v923 = vpack.c.b16 %v547, %v543
    %v924 = vpack.c.b16 %v548, %v544
    %v925 = vpack.c.b16 %v553, %v549
    %v926 = vpack.c.b16 %v554, %v550
    %v927 = vpack.c.b16 %v555, %v551
    %v928 = vpack.c.b16 %v556, %v552
    %v929 = vpack.c.b16 %v561, %v557
    %v930 = vpack.c.b16 %v562, %v558
    %v931 = vpack.c.b16 %v563, %v559
    %v932 = vpack.c.b16 %v564, %v560
    %v933 = vpack.c.b16 %v569, %v565
    %v934 = vpack.c.b16 %v570, %v566
    %v935 = vpack.c.b16 %v571, %v567
    %v936 = vpack.c.b16 %v572, %v568
    %v937 = vpack.c.b16 %v577, %v573
    %v938 = vpack.c.b16 %v578, %v574
    %v939 = vpack.c.b16 %v579, %v575
    %v940 = vpack.c.b16 %v580, %v576
    %v941 = vpack.c.b16 %v585, %v581
    %v942 = vpack.c.b16 %v586, %v582
    %v943 = vpack.c.b16 %v587, %v583
    %v944 = vpack.c.b16 %v588, %v584
    %v945 = vpack.c.b16 %v593, %v589
    %v946 = vpack.c.b16 %v594, %v590
    %v947 = vpack.c.b16 %v595, %v591
    %v948 = vpack.c.b16 %v596, %v592
    %v949 = vpack.c.b16 %v601, %v597
    %v950 = vpack.c.b16 %v602, %v598
    %v951 = vpack.c.b16 %v603, %v599
    %v952 = vpack.c.b16 %v604, %v600
    %v953 = vpack.c.b16 %v609, %v605
    %v954 = vpack.c.b16 %v610, %v606
    %v955 = vpack.c.b16 %v611, %v607
    %v956 = vpack.c.b16 %v612, %v608
    %v957 = vpack.c.b16 %v617, %v613
    %v958 = vpack.c.b16 %v618, %v614
    %v959 = vpack.c.b16 %v619, %v615
    %v960 = vpack.c.b16 %v620, %v616
    %v961 = vpack.c.b16 %v625, %v621
    %v962 = vpack.c.b16 %v626, %v622
    %v963 = vpack.c.b16 %v627, %v623
    %v964 = vpack.c.b16 %v628, %v624
    %v965 = vpack.c.b16 %v633, %v629
    %v966 = vpack.c.b16 %v634, %v630
    %v967 = vpack.c.b16 %v635, %v631
    %v968 = vpack.c.b16 %v636, %v632
    %v969 = vpack.c.b16 %v641, %v637
    %v970 = vpack.c.b16 %v642, %v638
    %v971 = vpack.c.b16 %v643, %v639
    %v972 = vpack.c.b16 %v644, %v640
    %v973 = vpack.c.b16 %v649, %v645
    %v974 = vpack.c.b16 %v650, %v646
    %v975 = vpack.c.b16 %v651, %v647
    %v976 = vpack.c.b16 %v652, %v648
    %v977 = vpack.c.b16 %v657, %v653
    %v978 = vpack.c.b16 %v658, %v654
    %v979 = vpack.c.b16 %v659, %v655
    %v980 = vpack.c.b16 %v660, %v656
    %v981 = vpack.c.b16 %v665, %v661
    %v982 = vpack.c.b16 %v666, %v662
    %v983 = vpack.c.b16 %v667, %v663
    %v984 = vpack.c.b16 %v668, %v664
    %v985 = vpack.c.b16 %v673, %v669
    %v986 = vpack.c.b16 %v674, %v670
    %v987 = vpack.c.b16 %v675, %v671
    %v988 = vpack.c.b16 %v676, %v672
    %v989 = vpack.c.b16 %v681, %v677
    %v990 = vpack.c.b16 %v682, %v678
    %v991 = vpack.c.b16 %v683, %v679
    %v992 = vpack.c.b16 %v684, %v680
    %v993 = vpack.c.b16 %v689, %v685
    %v994 = vpack.c.b16 %v690, %v686
    %v995 = vpack.c.b16 %v691, %v687
    %v996 = vpack.c.b16 %v692, %v688
    %v997 = vpack.c.b16 %v697, %v693
    %v998 = vpack.c.b16 %v698, %v694
    %v999 = vpack.c.b16 %v699, %v695
    %v1000 = vpack.c.b16 %v700, %v696
    %v1001 = vpack.c.b16 %v705, %v701
    %v1002 = vpack.c.b16 %v706, %v702
    %v1003 = vpack.c.b16 %v707, %v703
    %v1004 = vpack.c.b16 %v708, %v704
    %v1005 = vpack.c.b16 %v713, %v709
    %v1006 = vpack.c.b16 %v714, %v710
    %v1007 = vpack.c.b16 %v715, %v711
    %v1008 = vpack.c.b16 %v716, %v712
    %v1009 = vpack.c.b16 %v721, %v717
    %v1010 = vpack.c.b16 %v722, %v718
    %v1011 = vpack.c.b16 %v723, %v719
    %v1012 = vpack.c.b16 %v724, %v720
    %v1013 = vpack.c.b16 %v729, %v725
    %v1014 = vpack.c.b16 %v730, %v726
    %v1015 = vpack.c.b16 %v731, %v727
    %v1016 = vpack.c.b16 %v732, %v728
    %v1017 = vpack.c.b16 %v737, %v733
    %v1018 = vpack.c.b16 %v738, %v734
    %v1019 = vpack.c.b16 %v739, %v735
    %v1020 = vpack.c.b16 %v740, %v736
    %v1021 = vpack.c.b16 %v745, %v741
    %v1022 = vpack.c.b16 %v746, %v742
    %v1023 = vpack.c.b16 %v747, %v743
    %v1024 = vpack.c.b16 %v748, %v744
    %v1025 = vpack.c.b16 %v753, %v749
    %v1026 = vpack.c.b16 %v754, %v750
    %v1027 = vpack.c.b16 %v755, %v751
    %v1028 = vpack.c.b16 %v756, %v752
    %v1029 = vpack.c.b16 %v761, %v757
    %v1030 = vpack.c.b16 %v762, %v758
    %v1031 = vpack.c.b16 %v763, %v759
    %v1032 = vpack.c.b16 %v764, %v760
    %v1033 = vpack.c.b16 %v769, %v765
    %v1034 = vpack.c.b16 %v770, %v766
    %v1035 = vpack.c.b16 %v771, %v767
    %v1036 = vpack.c.b16 %v772, %v768
    %v1037 = vpack.c.b16 %v777, %v773
    %v1038 = vpack.c.b16 %v778, %v774
    %v1039 = vpack.c.b16 %v779, %v775
    %v1040 = vpack.c.b16 %v780, %v776
    %v1041 = vpack.c.b16 %v785, %v781
    %v1042 = vpack.c.b16 %v786, %v782
    %v1043 = vpack.c.b16 %v787, %v783
    %v1044 = vpack.c.b16 %v788, %v784
    %v1045 = vpack.c.b16 %v793, %v789
    %v1046 = vpack.c.b16 %v794, %v790
    %v1047 = vpack.c.b16 %v795, %v791
    %v1048 = vpack.c.b16 %v796, %v792
    %v1049 = vpack.c.b16 %v801, %v797
    %v1050 = vpack.c.b16 %v802, %v798
    %v1051 = vpack.c.b16 %v803, %v799
    %v1052 = vpack.c.b16 %v804, %v800
    %v1053 = vpack.c.b16 %v809, %v805
    %v1054 = vpack.c.b16 %v810, %v806
    %v1055 = vpack.c.b16 %v811, %v807
    %v1056 = vpack.c.b16 %v812, %v808
    %v1057 = vpack.c.b16 %v817, %v813
    %v1058 = vpack.c.b16 %v818, %v814
    %v1059 = vpack.c.b16 %v819, %v815
    %v1060 = vpack.c.b16 %v820, %v816
    %v1061 = vpack.c.b16 %v825, %v821
    %v1062 = vpack.c.b16 %v826, %v822
    %v1063 = vpack.c.b16 %v827, %v823
    %v1064 = vpack.c.b16 %v828, %v824
    %v1065 = vpack.c.b16 %v833, %v829
    %v1066 = vpack.c.b16 %v834, %v830
    %v1067 = vpack.c.b16 %v835, %v831
    %v1068 = vpack.c.b16 %v836, %v832
    %v1069 = vpack.c.b16 %v841, %v837
    %v1070 = vpack.c.b16 %v842, %v838
    %v1071 = vpack.c.b16 %v843, %v839
    %v1072 = vpack.c.b16 %v844, %v840
    %v1073 = vpack.c.b16 %v849, %v845
    %v1074 = vpack.c.b16 %v850, %v846
    %v1075 = vpack.c.b16 %v851, %v847
    %v1076 = vpack.c.b16 %v852, %v848
    %v1077 = vpack.c.b16 %v857, %v853
    %v1078 = vpack.c.b16 %v858, %v854
    %v1079 = vpack.c.b16 %v859, %v855
    %v1080 = vpack.c.b16 %v860, %v856
    %v1081 = vpack.c.b16 %v865, %v861
    %v1082 = vpack.c.b16 %v866, %v862
    %v1083 = vpack.c.b16 %v867, %v863
    %v1084 = vpack.c.b16 %v868, %v864
    %v1085 = vpack.c.b16 %v873, %v869
    %v1086 = vpack.c.b16 %v874, %v870
    %v1087 = vpack.c.b16 %v875, %v871
    %v1088 = vpack.c.b16 %v876, %v872
    %v1089 = vpack.c.b16 %v881, %v877
    %v1090 = vpack.c.b16 %v882, %v878
    %v1091 = vpack.c.b16 %v883, %v879
    %v1092 = vpack.c.b16 %v884, %v880
    %v1093 = vpack.c.b16 %v889, %v885
    %v1094 = vpack.c.b16 %v890, %v886
    %v1095 = vpack.c.b16 %v891, %v887
    %v1096 = vpack.c.b16 %v892, %v888
    %v1097 = vpack.c.b16 %v897, %v893
    %v1098 = vpack.c.b16 %v898, %v894
    %v1099 = vpack.c.b16 %v899, %v895
    %v1100 = vpack.c.b16 %v900, %v896
    %vm1301 = vcmask 261120
    %v1303 = vsel %vm1301, %v78, 0
    %1305 = vmatprep.subr.bf16.mxu0 %v930
    %1306 = vmatpush1.bf16.msra.mxu0 %v929
    %1307 = vmatprep.subr.bf16.mxu0 %v926
    %1308 = vmatpush1.bf16.msra.mxu0 %v925
    %1309 = vmatprep.subr.bf16.mxu0 %v922
    %1310 = vmatpush1.bf16.msra.mxu0 %v921
    %1311 = vmatprep.subr.bf16.mxu0 %v918
    %1312 = vmatpush1.bf16.msra.mxu0 %v917
    %1313 = vmatprep.subr.bf16.mxu0 %v914
    %1314 = vmatpush1.bf16.msra.mxu0 %v913
    %1315 = vmatprep.subr.bf16.mxu0 %v910
    %1316 = vmatpush1.bf16.msra.mxu0 %v909
    %1317 = vmatprep.subr.bf16.mxu0 %v906
    %1318 = vmatpush1.bf16.msra.mxu0 %v905
    %1319 = vmatprep.subr.bf16.mxu0 %v902
    %1320 = vmatpush1.bf16.msra.mxu0 %v901
    %1321 = vmatprep.subr.bf16.mxu0 %v962
    %1322 = vmatpush2.bf16.msra.mxu0 %v961
    %1323 = vmatprep.subr.bf16.mxu0 %v958
    %1324 = vmatpush2.bf16.msra.mxu0 %v957
    %1325 = vmatprep.subr.bf16.mxu0 %v954
    %1326 = vmatpush2.bf16.msra.mxu0 %v953
    %1327 = vmatprep.subr.bf16.mxu0 %v950
    %1328 = vmatpush2.bf16.msra.mxu0 %v949
    %1329 = vmatprep.subr.bf16.mxu0 %v946
    %1330 = vmatpush2.bf16.msra.mxu0 %v945
    %1331 = vmatprep.subr.bf16.mxu0 %v942
    %1332 = vmatpush2.bf16.msra.mxu0 %v941
    %1333 = vmatprep.subr.bf16.mxu0 %v938
    %1334 = vmatpush2.bf16.msra.mxu0 %v937
    %1335 = vmatprep.subr.bf16.mxu0 %v934
    %1336 = vmatpush2.bf16.msra.mxu0 %v933
    %1337 = vmatprep.mubr.bf16.mxu0 %v73
    %1338 = vmatmul.mubr.bf16.gmra.mxu0 %v72
    %v1339 = vpop.f32.mrf.mxu0
    %v1340 = vadd.f32 %v284, %v1339
    %v1341 = vpop.f32.mrf.mxu0
    %v1342 = vadd.f32 %v288, %v1341
    %v1343 = vpop.f32.mrf.mxu0
    %v1344 = vpop.f32.mrf.mxu0
    %1345 = vdwg.mxu0
    %1346 = vmatprep.subr.bf16.mxu0 %v994
    %1347 = vmatpush1.bf16.msra.mxu0 %v993
    %1348 = vmatprep.subr.bf16.mxu0 %v990
    %1349 = vmatpush1.bf16.msra.mxu0 %v989
    %1350 = vmatprep.subr.bf16.mxu0 %v986
    %1351 = vmatpush1.bf16.msra.mxu0 %v985
    %1352 = vmatprep.subr.bf16.mxu0 %v982
    %1353 = vmatpush1.bf16.msra.mxu0 %v981
    %1354 = vmatprep.subr.bf16.mxu0 %v978
    %1355 = vmatpush1.bf16.msra.mxu0 %v977
    %1356 = vmatprep.subr.bf16.mxu0 %v974
    %1357 = vmatpush1.bf16.msra.mxu0 %v973
    %1358 = vmatprep.subr.bf16.mxu0 %v970
    %1359 = vmatpush1.bf16.msra.mxu0 %v969
    %1360 = vmatprep.subr.bf16.mxu0 %v966
    %1361 = vmatpush1.bf16.msra.mxu0 %v965
    %1362 = vmatprep.subr.bf16.mxu0 %v1026
    %1363 = vmatpush2.bf16.msra.mxu0 %v1025
    %1364 = vmatprep.subr.bf16.mxu0 %v1022
    %1365 = vmatpush2.bf16.msra.mxu0 %v1021
    %1366 = vmatprep.subr.bf16.mxu0 %v1018
    %1367 = vmatpush2.bf16.msra.mxu0 %v1017
    %1368 = vmatprep.subr.bf16.mxu0 %v1014
    %1369 = vmatpush2.bf16.msra.mxu0 %v1013
    %1370 = vmatprep.subr.bf16.mxu0 %v1010
    %1371 = vmatpush2.bf16.msra.mxu0 %v1009
    %1372 = vmatprep.subr.bf16.mxu0 %v1006
    %1373 = vmatpush2.bf16.msra.mxu0 %v1005
    %1374 = vmatprep.subr.bf16.mxu0 %v1002
    %1375 = vmatpush2.bf16.msra.mxu0 %v1001
    %1376 = vmatprep.subr.bf16.mxu0 %v998
    %1377 = vmatpush2.bf16.msra.mxu0 %v997
    %1378 = vmatprep.mubr.bf16.mxu0 %v75
    %1379 = vmatmul.mubr.bf16.gmra.mxu0 %v74
    %v1380 = vpop.f32.mrf.mxu0
    %v1381 = vadd.f32 %v1340, %v1380
    %v1382 = vpop.f32.mrf.mxu0
    %v1383 = vadd.f32 %v1342, %v1382
    %v1384 = vpop.f32.mrf.mxu0
    %v1385 = vpop.f32.mrf.mxu0
    %1386 = vdwg.mxu0
    %1387 = vmatprep.subr.bf16.mxu0 %v1058
    %1388 = vmatpush1.bf16.msra.mxu0 %v1057
    %1389 = vmatprep.subr.bf16.mxu0 %v1054
    %1390 = vmatpush1.bf16.msra.mxu0 %v1053
    %1391 = vmatprep.subr.bf16.mxu0 %v1050
    %1392 = vmatpush1.bf16.msra.mxu0 %v1049
    %1393 = vmatprep.subr.bf16.mxu0 %v1046
    %1394 = vmatpush1.bf16.msra.mxu0 %v1045
    %1395 = vmatprep.subr.bf16.mxu0 %v1042
    %1396 = vmatpush1.bf16.msra.mxu0 %v1041
    %1397 = vmatprep.subr.bf16.mxu0 %v1038
    %1398 = vmatpush1.bf16.msra.mxu0 %v1037
    %1399 = vmatprep.subr.bf16.mxu0 %v1034
    %1400 = vmatpush1.bf16.msra.mxu0 %v1033
    %1401 = vmatprep.subr.bf16.mxu0 %v1030
    %1402 = vmatpush1.bf16.msra.mxu0 %v1029
    %1403 = vmatprep.subr.bf16.mxu0 %v1090
    %1404 = vmatpush2.bf16.msra.mxu0 %v1089
    %1405 = vmatprep.subr.bf16.mxu0 %v1086
    %1406 = vmatpush2.bf16.msra.mxu0 %v1085
    %1407 = vmatprep.subr.bf16.mxu0 %v1082
    %1408 = vmatpush2.bf16.msra.mxu0 %v1081
    %1409 = vmatprep.subr.bf16.mxu0 %v1078
    %1410 = vmatpush2.bf16.msra.mxu0 %v1077
    %1411 = vmatprep.subr.bf16.mxu0 %v1074
    %1412 = vmatpush2.bf16.msra.mxu0 %v1073
    %1413 = vmatprep.subr.bf16.mxu0 %v1070
    %1414 = vmatpush2.bf16.msra.mxu0 %v1069
    %1415 = vmatprep.subr.bf16.mxu0 %v1066
    %1416 = vmatpush2.bf16.msra.mxu0 %v1065
    %1417 = vmatprep.subr.bf16.mxu0 %v1062
    %1418 = vmatpush2.bf16.msra.mxu0 %v1061
    %1419 = vmatprep.mubr.bf16.mxu0 %v77
    %1420 = vmatmul.mubr.bf16.gmra.mxu0 %v76
    %v1421 = vpop.f32.mrf.mxu0
    %v1422 = vadd.f32 %v1381, %v1421
    %v1423 = vpop.f32.mrf.mxu0
    %v1424 = vadd.f32 %v1383, %v1423
    %v1425 = vpop.f32.mrf.mxu0
    %v1426 = vpop.f32.mrf.mxu0
    %1427 = vdwg.mxu0
    %1428 = vmatprep.subr.bf16.mxu0 0
    %1429 = vmatpush1.bf16.msra.mxu0 0
    %1430 = vmatprep.subr.bf16.mxu0 0
    %1431 = vmatpush1.bf16.msra.mxu0 0
    %1432 = vmatprep.subr.bf16.mxu0 0
    %1433 = vmatpush1.bf16.msra.mxu0 0
    %1434 = vmatprep.subr.bf16.mxu0 0
    %1435 = vmatpush1.bf16.msra.mxu0 0
    %1436 = vmatprep.subr.bf16.mxu0 0
    %1437 = vmatpush1.bf16.msra.mxu0 0
    %1438 = vmatprep.subr.bf16.mxu0 0
    %1439 = vmatpush1.bf16.msra.mxu0 0
    %1440 = vmatprep.subr.bf16.mxu0 %v1098
    %1441 = vmatpush1.bf16.msra.mxu0 %v1097
    %1442 = vmatprep.subr.bf16.mxu0 %v1094
    %1443 = vmatpush1.bf16.msra.mxu0 %v1093
    %1444 = vmatprep.subr.bf16.mxu0 0
    %1445 = vmatpush2.bf16.msra.mxu0 0
    %1446 = vmatprep.subr.bf16.mxu0 0
    %1447 = vmatpush2.bf16.msra.mxu0 0
    %1448 = vmatprep.subr.bf16.mxu0 0
    %1449 = vmatpush2.bf16.msra.mxu0 0
    %1450 = vmatprep.subr.bf16.mxu0 0
    %1451 = vmatpush2.bf16.msra.mxu0 0
    %1452 = vmatprep.subr.bf16.mxu0 0
    %1453 = vmatpush2.bf16.msra.mxu0 0
    %1454 = vmatprep.subr.bf16.mxu0 0
    %1455 = vmatpush2.bf16.msra.mxu0 0
    %1456 = vmatprep.subr.bf16.mxu0 0
    %1457 = vmatpush2.bf16.msra.mxu0 0
    %1458 = vmatprep.subr.bf16.mxu0 0
    %1459 = vmatpush2.bf16.msra.mxu0 0
    %1460 = vmatprep.mubr.bf16.mxu0 0
    %1461 = vmatmul.mubr.bf16.gmra.mxu0 %v1303
    %v1462 = vpop.f32.mrf.mxu0
    %v1463 = vadd.f32 %v1422, %v1462
    %v1464 = vpop.f32.mrf.mxu0
    %v1465 = vadd.f32 %v1424, %v1464
    %v1466 = vpop.f32.mrf.mxu0
    %v1467 = vpop.f32.mrf.mxu0
    %1468 = vdwg.mxu0
    %1469 = vmatprep.subr.bf16.mxu0 %v932
    %1470 = vmatpush1.bf16.msra.mxu0 %v931
    %1471 = vmatprep.subr.bf16.mxu0 %v928
    %1472 = vmatpush1.bf16.msra.mxu0 %v927
    %1473 = vmatprep.subr.bf16.mxu0 %v924
    %1474 = vmatpush1.bf16.msra.mxu0 %v923
    %1475 = vmatprep.subr.bf16.mxu0 %v920
    %1476 = vmatpush1.bf16.msra.mxu0 %v919
    %1477 = vmatprep.subr.bf16.mxu0 %v916
    %1478 = vmatpush1.bf16.msra.mxu0 %v915
    %1479 = vmatprep.subr.bf16.mxu0 %v912
    %1480 = vmatpush1.bf16.msra.mxu0 %v911
    %1481 = vmatprep.subr.bf16.mxu0 %v908
    %1482 = vmatpush1.bf16.msra.mxu0 %v907
    %1483 = vmatprep.subr.bf16.mxu0 %v904
    %1484 = vmatpush1.bf16.msra.mxu0 %v903
    %1485 = vmatprep.subr.bf16.mxu0 %v964
    %1486 = vmatpush2.bf16.msra.mxu0 %v963
    %1487 = vmatprep.subr.bf16.mxu0 %v960
    %1488 = vmatpush2.bf16.msra.mxu0 %v959
    %1489 = vmatprep.subr.bf16.mxu0 %v956
    %1490 = vmatpush2.bf16.msra.mxu0 %v955
    %1491 = vmatprep.subr.bf16.mxu0 %v952
    %1492 = vmatpush2.bf16.msra.mxu0 %v951
    %1493 = vmatprep.subr.bf16.mxu0 %v948
    %1494 = vmatpush2.bf16.msra.mxu0 %v947
    %1495 = vmatprep.subr.bf16.mxu0 %v944
    %1496 = vmatpush2.bf16.msra.mxu0 %v943
    %1497 = vmatprep.subr.bf16.mxu0 %v940
    %1498 = vmatpush2.bf16.msra.mxu0 %v939
    %1499 = vmatprep.subr.bf16.mxu0 %v936
    %1500 = vmatpush2.bf16.msra.mxu0 %v935
    %1501 = vmatprep.mubr.bf16.mxu0 %v73
    %1502 = vmatmul.mubr.bf16.gmra.mxu0 %v72
    %v1503 = vpop.f32.mrf.mxu0
    %v1504 = vadd.f32 %v292, %v1503
    %v1505 = vpop.f32.mrf.mxu0
    %v1506 = vadd.f32 %v296, %v1505
    %v1507 = vpop.f32.mrf.mxu0
    %v1508 = vpop.f32.mrf.mxu0
    %1509 = vdwg.mxu0
    %1510 = vmatprep.subr.bf16.mxu0 %v996
    %1511 = vmatpush1.bf16.msra.mxu0 %v995
    %1512 = vmatprep.subr.bf16.mxu0 %v992
    %1513 = vmatpush1.bf16.msra.mxu0 %v991
    %1514 = vmatprep.subr.bf16.mxu0 %v988
    %1515 = vmatpush1.bf16.msra.mxu0 %v987
    %1516 = vmatprep.subr.bf16.mxu0 %v984
    %1517 = vmatpush1.bf16.msra.mxu0 %v983
    %1518 = vmatprep.subr.bf16.mxu0 %v980
    %1519 = vmatpush1.bf16.msra.mxu0 %v979
    %1520 = vmatprep.subr.bf16.mxu0 %v976
    %1521 = vmatpush1.bf16.msra.mxu0 %v975
    %1522 = vmatprep.subr.bf16.mxu0 %v972
    %1523 = vmatpush1.bf16.msra.mxu0 %v971
    %1524 = vmatprep.subr.bf16.mxu0 %v968
    %1525 = vmatpush1.bf16.msra.mxu0 %v967
    %1526 = vmatprep.subr.bf16.mxu0 %v1028
    %1527 = vmatpush2.bf16.msra.mxu0 %v1027
    %1528 = vmatprep.subr.bf16.mxu0 %v1024
    %1529 = vmatpush2.bf16.msra.mxu0 %v1023
    %1530 = vmatprep.subr.bf16.mxu0 %v1020
    %1531 = vmatpush2.bf16.msra.mxu0 %v1019
    %1532 = vmatprep.subr.bf16.mxu0 %v1016
    %1533 = vmatpush2.bf16.msra.mxu0 %v1015
    %1534 = vmatprep.subr.bf16.mxu0 %v1012
    %1535 = vmatpush2.bf16.msra.mxu0 %v1011
    %1536 = vmatprep.subr.bf16.mxu0 %v1008
    %1537 = vmatpush2.bf16.msra.mxu0 %v1007
    %1538 = vmatprep.subr.bf16.mxu0 %v1004
    %1539 = vmatpush2.bf16.msra.mxu0 %v1003
    %1540 = vmatprep.subr.bf16.mxu0 %v1000
    %1541 = vmatpush2.bf16.msra.mxu0 %v999
    %1542 = vmatprep.mubr.bf16.mxu0 %v75
    %1543 = vmatmul.mubr.bf16.gmra.mxu0 %v74
    %v1544 = vpop.f32.mrf.mxu0
    %v1545 = vadd.f32 %v1504, %v1544
    %v1546 = vpop.f32.mrf.mxu0
    %v1547 = vadd.f32 %v1506, %v1546
    %v1548 = vpop.f32.mrf.mxu0
    %v1549 = vpop.f32.mrf.mxu0
    %1550 = vdwg.mxu0
    %1551 = vmatprep.subr.bf16.mxu0 %v1060
    %1552 = vmatpush1.bf16.msra.mxu0 %v1059
    %1553 = vmatprep.subr.bf16.mxu0 %v1056
    %1554 = vmatpush1.bf16.msra.mxu0 %v1055
    %1555 = vmatprep.subr.bf16.mxu0 %v1052
    %1556 = vmatpush1.bf16.msra.mxu0 %v1051
    %1557 = vmatprep.subr.bf16.mxu0 %v1048
    %1558 = vmatpush1.bf16.msra.mxu0 %v1047
    %1559 = vmatprep.subr.bf16.mxu0 %v1044
    %1560 = vmatpush1.bf16.msra.mxu0 %v1043
    %1561 = vmatprep.subr.bf16.mxu0 %v1040
    %1562 = vmatpush1.bf16.msra.mxu0 %v1039
    %1563 = vmatprep.subr.bf16.mxu0 %v1036
    %1564 = vmatpush1.bf16.msra.mxu0 %v1035
    %1565 = vmatprep.subr.bf16.mxu0 %v1032
    %1566 = vmatpush1.bf16.msra.mxu0 %v1031
    %1567 = vmatprep.subr.bf16.mxu0 %v1092
    %1568 = vmatpush2.bf16.msra.mxu0 %v1091
    %1569 = vmatprep.subr.bf16.mxu0 %v1088
    %1570 = vmatpush2.bf16.msra.mxu0 %v1087
    %1571 = vmatprep.subr.bf16.mxu0 %v1084
    %1572 = vmatpush2.bf16.msra.mxu0 %v1083
    %1573 = vmatprep.subr.bf16.mxu0 %v1080
    %1574 = vmatpush2.bf16.msra.mxu0 %v1079
    %1575 = vmatprep.subr.bf16.mxu0 %v1076
    %1576 = vmatpush2.bf16.msra.mxu0 %v1075
    %1577 = vmatprep.subr.bf16.mxu0 %v1072
    %1578 = vmatpush2.bf16.msra.mxu0 %v1071
    %1579 = vmatprep.subr.bf16.mxu0 %v1068
    %1580 = vmatpush2.bf16.msra.mxu0 %v1067
    %1581 = vmatprep.subr.bf16.mxu0 %v1064
    %1582 = vmatpush2.bf16.msra.mxu0 %v1063
    %1583 = vmatprep.mubr.bf16.mxu0 %v77
    %1584 = vmatmul.mubr.bf16.gmra.mxu0 %v76
    %v1585 = vpop.f32.mrf.mxu0
    %v1586 = vadd.f32 %v1545, %v1585
    %v1587 = vpop.f32.mrf.mxu0
    %v1588 = vadd.f32 %v1547, %v1587
    %v1589 = vpop.f32.mrf.mxu0
    %v1590 = vpop.f32.mrf.mxu0
    %1591 = vdwg.mxu0
    %1592 = vmatprep.subr.bf16.mxu0 0
    %1593 = vmatpush1.bf16.msra.mxu0 0
    %1594 = vmatprep.subr.bf16.mxu0 0
    %1595 = vmatpush1.bf16.msra.mxu0 0
    %1596 = vmatprep.subr.bf16.mxu0 0
    %1597 = vmatpush1.bf16.msra.mxu0 0
    %1598 = vmatprep.subr.bf16.mxu0 0
    %1599 = vmatpush1.bf16.msra.mxu0 0
    %1600 = vmatprep.subr.bf16.mxu0 0
    %1601 = vmatpush1.bf16.msra.mxu0 0
    %1602 = vmatprep.subr.bf16.mxu0 0
    %1603 = vmatpush1.bf16.msra.mxu0 0
    %1604 = vmatprep.subr.bf16.mxu0 %v1100
    %1605 = vmatpush1.bf16.msra.mxu0 %v1099
    %1606 = vmatprep.subr.bf16.mxu0 %v1096
    %1607 = vmatpush1.bf16.msra.mxu0 %v1095
    %1608 = vmatprep.subr.bf16.mxu0 0
    %1609 = vmatpush2.bf16.msra.mxu0 0
    %1610 = vmatprep.subr.bf16.mxu0 0
    %1611 = vmatpush2.bf16.msra.mxu0 0
    %1612 = vmatprep.subr.bf16.mxu0 0
    %1613 = vmatpush2.bf16.msra.mxu0 0
    %1614 = vmatprep.subr.bf16.mxu0 0
    %1615 = vmatpush2.bf16.msra.mxu0 0
    %1616 = vmatprep.subr.bf16.mxu0 0
    %1617 = vmatpush2.bf16.msra.mxu0 0
    %1618 = vmatprep.subr.bf16.mxu0 0
    %1619 = vmatpush2.bf16.msra.mxu0 0
    %1620 = vmatprep.subr.bf16.mxu0 0
    %1621 = vmatpush2.bf16.msra.mxu0 0
    %1622 = vmatprep.subr.bf16.mxu0 0
    %1623 = vmatpush2.bf16.msra.mxu0 0
    %1624 = vmatprep.mubr.bf16.mxu0 0
    %1625 = vmatmul.mubr.bf16.gmra.mxu0 %v1303
    %v1626 = vpop.f32.mrf.mxu0
    %v1627 = vadd.f32 %v1586, %v1626
    %v1628 = vpop.f32.mrf.mxu0
    %v1629 = vadd.f32 %v1588, %v1628
    %v1630 = vpop.f32.mrf.mxu0
    %v1631 = vpop.f32.mrf.mxu0
    %1632 = vdwg.mxu0
    %v1633 = vmul.f32 %v1463, 0.5
    %v1634 = vmul.f32 %v1465, 0.5
    %v1635 = vmul.f32 %v1627, 0.5
    %v1636 = vmul.f32 %v1629, 0.5
    %v1637 = vmul.f32 %v1463, 0.044715
    %v1638 = vmul.f32 %v1465, 0.044715
    %v1639 = vmul.f32 %v1627, 0.044715
    %v1640 = vmul.f32 %v1629, 0.044715
    %v1641 = vmul.f32 %v1637, %v1463
    %v1642 = vmul.f32 %v1638, %v1465
    %v1643 = vmul.f32 %v1639, %v1627
    %v1644 = vmul.f32 %v1640, %v1629
    %v1645 = vmul.f32 %v1641, %v1463
    %v1646 = vmul.f32 %v1642, %v1465
    %v1647 = vmul.f32 %v1643, %v1627
    %v1648 = vmul.f32 %v1644, %v1629
    %v1649 = vadd.f32 %v1463, %v1645
    %v1650 = vadd.f32 %v1465, %v1646
    %v1651 = vadd.f32 %v1627, %v1647
    %v1652 = vadd.f32 %v1629, %v1648
    %v1653 = vmul.f32 %v1649, 0.7978846
    %v1654 = vmul.f32 %v1650, 0.7978846
    %v1655 = vmul.f32 %v1651, 0.7978846
    %v1656 = vmul.f32 %v1652, 0.7978846
    %v1657 = vtanh.pop %v1653
    %v1658 = vtanh.pop %v1654
    %v1659 = vtanh.pop %v1655
    %v1660 = vtanh.pop %v1656
    %v1661 = vadd.f32 %v1657, 1.0
    %v1662 = vadd.f32 %v1658, 1.0
    %v1663 = vadd.f32 %v1659, 1.0
    %v1664 = vadd.f32 %v1660, 1.0
    %v1665 = vmul.f32 %v1633, %v1661
    %v1666 = vmul.f32 %v1634, %v1662
    %v1667 = vmul.f32 %v1635, %v1663
    %v1668 = vmul.f32 %v1636, %v1664
    %v1669 = vpack.c.bf16 %v1665, %v1665
    %v1670 = vpack.c.bf16 %v1666, %v1666
    %v1671 = vpack.c.bf16 %v1667, %v1667
    %v1672 = vpack.c.bf16 %v1668, %v1668
    %v1673 = vld [vmem:[%s3] sm:$0xff]
    %v1674 = vld [vmem:[%s3 + $0x8] sm:$0xff]
    %v1675 = vld [vmem:[%s3 + $0x10] sm:$0xff]
    %v1676 = vld [vmem:[%s3 + $0x18] sm:$0xff]
    %v1677 = vld [vmem:[%s3 + $0x20] sm:$0xff]
    %v1678 = vld [vmem:[%s3 + $0x28] sm:$0xff]
    %v1679 = vld [vmem:[%s3 + $0x30] sm:$0xff]
    %v1680 = vld [vmem:[%s3 + $0x38] sm:$0xff]
    %v1681 = vld [vmem:[%s3 + $0x40] sm:$0xff]
    %v1682 = vld [vmem:[%s3 + $0x48] sm:$0xff]
    %v1683 = vld [vmem:[%s3 + $0x50] sm:$0xff]
    %v1684 = vld [vmem:[%s3 + $0x58] sm:$0xff]
    %v1685 = vld [vmem:[%s3 + $0x60] sm:$0xff]
    %v1686 = vld [vmem:[%s3 + $0x68] sm:$0xff]
    %v1687 = vld [vmem:[%s3 + $0x70] sm:$0xff]
    %v1688 = vld [vmem:[%s3 + $0x78] sm:$0xff]
    %v1689 = vld [vmem:[%s3 + $0x80] sm:$0xff]
    %v1690 = vld [vmem:[%s3 + $0x88] sm:$0xff]
    %v1691 = vld [vmem:[%s3 + $0x90] sm:$0xff]
    %v1692 = vld [vmem:[%s3 + $0x98] sm:$0xff]
    %v1693 = vld [vmem:[%s3 + $0xa0] sm:$0xff]
    %v1694 = vld [vmem:[%s3 + $0xa8] sm:$0xff]
    %v1695 = vld [vmem:[%s3 + $0xb0] sm:$0xff]
    %v1696 = vld [vmem:[%s3 + $0xb8] sm:$0xff]
    %v1697 = vld [vmem:[%s3 + $0xc0] sm:$0xff]
    %v1698 = vld [vmem:[%s3 + $0xc8] sm:$0xff]
    %v1699 = vld [vmem:[%s3 + $0xd0] sm:$0xff]
    %v1700 = vld [vmem:[%s3 + $0xd8] sm:$0xff]
    %v1701 = vld [vmem:[%s3 + $0xe0] sm:$0xff]
    %v1702 = vld [vmem:[%s3 + $0xe8] sm:$0xff]
    %v1703 = vld [vmem:[%s3 + $0xf0] sm:$0xff]
    %v1704 = vld [vmem:[%s3 + $0xf8] sm:$0xff]
    %v1705 = vld [vmem:[%s3 + $0x100] sm:$0xff]
    %v1706 = vld [vmem:[%s3 + $0x108] sm:$0xff]
    %v1707 = vld [vmem:[%s3 + $0x110] sm:$0xff]
    %v1708 = vld [vmem:[%s3 + $0x118] sm:$0xff]
    %v1709 = vld [vmem:[%s3 + $0x120] sm:$0xff]
    %v1710 = vld [vmem:[%s3 + $0x128] sm:$0xff]
    %v1711 = vld [vmem:[%s3 + $0x130] sm:$0xff]
    %v1712 = vld [vmem:[%s3 + $0x138] sm:$0xff]
    %v1713 = vld [vmem:[%s3 + $0x140] sm:$0xff]
    %v1714 = vld [vmem:[%s3 + $0x148] sm:$0xff]
    %v1715 = vld [vmem:[%s3 + $0x150] sm:$0xff]
    %v1716 = vld [vmem:[%s3 + $0x158] sm:$0xff]
    %v1717 = vld [vmem:[%s3 + $0x160] sm:$0xff]
    %v1718 = vld [vmem:[%s3 + $0x168] sm:$0xff]
    %v1719 = vld [vmem:[%s3 + $0x170] sm:$0xff]
    %v1720 = vld [vmem:[%s3 + $0x178] sm:$0xff]
    %v1721 = vld [vmem:[%s3 + $0x180] sm:$0xff]
    %v1722 = vld [vmem:[%s3 + $0x188] sm:$0xff]
    %v1723 = vld [vmem:[%s3 + $0x190] sm:$0xff]
    %v1724 = vld [vmem:[%s3 + $0x198] sm:$0xff]
    %v1725 = vld [vmem:[%s3 + $0x1a0] sm:$0xff]
    %v1726 = vld [vmem:[%s3 + $0x1a8] sm:$0xff]
    %v1727 = vld [vmem:[%s3 + $0x1b0] sm:$0xff]
    %v1728 = vld [vmem:[%s3 + $0x1b8] sm:$0xff]
    %v1729 = vld [vmem:[%s3 + $0x1c0] sm:$0xff]
    %v1730 = vld [vmem:[%s3 + $0x1c8] sm:$0xff]
    %v1731 = vld [vmem:[%s3 + $0x1d0] sm:$0xff]
    %v1732 = vld [vmem:[%s3 + $0x1d8] sm:$0xff]
    %v1733 = vld [vmem:[%s3 + $0x1e0] sm:$0xff]
    %v1734 = vld [vmem:[%s3 + $0x1e8] sm:$0xff]
    %v1735 = vld [vmem:[%s3 + $0x1f0] sm:$0xff]
    %v1736 = vld [vmem:[%s3 + $0x1f8] sm:$0xff]
    %v1737 = vld [vmem:[%s3 + $0x200] sm:$0xff]
    %v1738 = vld [vmem:[%s3 + $0x208] sm:$0xff]
    %v1739 = vld [vmem:[%s3 + $0x210] sm:$0xff]
    %v1740 = vld [vmem:[%s3 + $0x218] sm:$0xff]
    %v1741 = vld [vmem:[%s3 + $0x220] sm:$0xff]
    %v1742 = vld [vmem:[%s3 + $0x228] sm:$0xff]
    %v1743 = vld [vmem:[%s3 + $0x230] sm:$0xff]
    %v1744 = vld [vmem:[%s3 + $0x238] sm:$0xff]
    %v1745 = vld [vmem:[%s3 + $0x240] sm:$0xff]
    %v1746 = vld [vmem:[%s3 + $0x248] sm:$0xff]
    %v1747 = vld [vmem:[%s3 + $0x250] sm:$0xff]
    %v1748 = vld [vmem:[%s3 + $0x258] sm:$0xff]
    %v1749 = vld [vmem:[%s3 + $0x260] sm:$0xff]
    %v1750 = vld [vmem:[%s3 + $0x268] sm:$0xff]
    %v1751 = vld [vmem:[%s3 + $0x270] sm:$0xff]
    %v1752 = vld [vmem:[%s3 + $0x278] sm:$0xff]
    %v1753 = vld [vmem:[%s3 + $0x280] sm:$0xff]
    %v1754 = vld [vmem:[%s3 + $0x288] sm:$0xff]
    %v1755 = vld [vmem:[%s3 + $0x290] sm:$0xff]
    %v1756 = vld [vmem:[%s3 + $0x298] sm:$0xff]
    %v1757 = vld [vmem:[%s3 + $0x2a0] sm:$0xff]
    %v1758 = vld [vmem:[%s3 + $0x2a8] sm:$0xff]
    %v1759 = vld [vmem:[%s3 + $0x2b0] sm:$0xff]
    %v1760 = vld [vmem:[%s3 + $0x2b8] sm:$0xff]
    %v1761 = vld [vmem:[%s3 + $0x2c0] sm:$0xff]
    %v1762 = vld [vmem:[%s3 + $0x2c8] sm:$0xff]
    %v1763 = vld [vmem:[%s3 + $0x2d0] sm:$0xff]
    %v1764 = vld [vmem:[%s3 + $0x2d8] sm:$0xff]
    %v1765 = vld [vmem:[%s3 + $0x2e0] sm:$0xff]
    %v1766 = vld [vmem:[%s3 + $0x2e8] sm:$0xff]
    %v1767 = vld [vmem:[%s3 + $0x2f0] sm:$0xff]
    %v1768 = vld [vmem:[%s3 + $0x2f8] sm:$0xff]
    %v1769 = vld [vmem:[%s3 + $0x300] sm:$0xff]
    %v1770 = vld [vmem:[%s3 + $0x308] sm:$0xff]
    %v1771 = vld [vmem:[%s3 + $0x310] sm:$0xff]
    %v1772 = vld [vmem:[%s3 + $0x318] sm:$0xff]
    %v1773 = vld [vmem:[%s4] sm:$0xf]
    %v1775 = vlaneseq
    %v1776 = vshrl.u32 %v1775, 7
    %v1777 = vsub.s32 0, %v1776
    %v1778 = vrot.slane %v1773, %v1777
    %v1779 = vlaneseq
    %v1780 = vshrl.u32 %v1779, 7
    %v1781 = vsub.s32 1, %v1780
    %v1782 = vrot.slane %v1773, %v1781
    %v1783 = vlaneseq
    %v1784 = vshrl.u32 %v1783, 7
    %v1785 = vsub.s32 2, %v1784
    %v1786 = vrot.slane %v1773, %v1785
    %v1787 = vlaneseq
    %v1788 = vshrl.u32 %v1787, 7
    %v1789 = vsub.s32 3, %v1788
    %v1790 = vrot.slane %v1773, %v1789
    %v1895 = vunpack.c.l.b16 %v1673
    %v1896 = vunpack.c.h.b16 %v1673
    %v1897 = vunpack.c.l.b16 %v1674
    %v1898 = vunpack.c.h.b16 %v1674
    %v1899 = vunpack.c.l.b16 %v1675
    %v1900 = vunpack.c.h.b16 %v1675
    %v1901 = vunpack.c.l.b16 %v1676
    %v1902 = vunpack.c.h.b16 %v1676
    %v1903 = vunpack.c.l.b16 %v1677
    %v1904 = vunpack.c.h.b16 %v1677
    %v1905 = vunpack.c.l.b16 %v1678
    %v1906 = vunpack.c.h.b16 %v1678
    %v1907 = vunpack.c.l.b16 %v1679
    %v1908 = vunpack.c.h.b16 %v1679
    %v1909 = vunpack.c.l.b16 %v1680
    %v1910 = vunpack.c.h.b16 %v1680
    %v1911 = vunpack.c.l.b16 %v1681
    %v1912 = vunpack.c.h.b16 %v1681
    %v1913 = vunpack.c.l.b16 %v1682
    %v1914 = vunpack.c.h.b16 %v1682
    %v1915 = vunpack.c.l.b16 %v1683
    %v1916 = vunpack.c.h.b16 %v1683
    %v1917 = vunpack.c.l.b16 %v1684
    %v1918 = vunpack.c.h.b16 %v1684
    %v1919 = vunpack.c.l.b16 %v1685
    %v1920 = vunpack.c.h.b16 %v1685
    %v1921 = vunpack.c.l.b16 %v1686
    %v1922 = vunpack.c.h.b16 %v1686
    %v1923 = vunpack.c.l.b16 %v1687
    %v1924 = vunpack.c.h.b16 %v1687
    %v1925 = vunpack.c.l.b16 %v1688
    %v1926 = vunpack.c.h.b16 %v1688
    %v1927 = vunpack.c.l.b16 %v1689
    %v1928 = vunpack.c.h.b16 %v1689
    %v1929 = vunpack.c.l.b16 %v1690
    %v1930 = vunpack.c.h.b16 %v1690
    %v1931 = vunpack.c.l.b16 %v1691
    %v1932 = vunpack.c.h.b16 %v1691
    %v1933 = vunpack.c.l.b16 %v1692
    %v1934 = vunpack.c.h.b16 %v1692
    %v1935 = vunpack.c.l.b16 %v1693
    %v1936 = vunpack.c.h.b16 %v1693
    %v1937 = vunpack.c.l.b16 %v1694
    %v1938 = vunpack.c.h.b16 %v1694
    %v1939 = vunpack.c.l.b16 %v1695
    %v1940 = vunpack.c.h.b16 %v1695
    %v1941 = vunpack.c.l.b16 %v1696
    %v1942 = vunpack.c.h.b16 %v1696
    %v1943 = vunpack.c.l.b16 %v1697
    %v1944 = vunpack.c.h.b16 %v1697
    %v1945 = vunpack.c.l.b16 %v1698
    %v1946 = vunpack.c.h.b16 %v1698
    %v1947 = vunpack.c.l.b16 %v1699
    %v1948 = vunpack.c.h.b16 %v1699
    %v1949 = vunpack.c.l.b16 %v1700
    %v1950 = vunpack.c.h.b16 %v1700
    %v1951 = vunpack.c.l.b16 %v1701
    %v1952 = vunpack.c.h.b16 %v1701
    %v1953 = vunpack.c.l.b16 %v1702
    %v1954 = vunpack.c.h.b16 %v1702
    %v1955 = vunpack.c.l.b16 %v1703
    %v1956 = vunpack.c.h.b16 %v1703
    %v1957 = vunpack.c.l.b16 %v1704
    %v1958 = vunpack.c.h.b16 %v1704
    %v1959 = vunpack.c.l.b16 %v1705
    %v1960 = vunpack.c.h.b16 %v1705
    %v1961 = vunpack.c.l.b16 %v1706
    %v1962 = vunpack.c.h.b16 %v1706
    %v1963 = vunpack.c.l.b16 %v1707
    %v1964 = vunpack.c.h.b16 %v1707
    %v1965 = vunpack.c.l.b16 %v1708
    %v1966 = vunpack.c.h.b16 %v1708
    %v1967 = vunpack.c.l.b16 %v1709
    %v1968 = vunpack.c.h.b16 %v1709
    %v1969 = vunpack.c.l.b16 %v1710
    %v1970 = vunpack.c.h.b16 %v1710
    %v1971 = vunpack.c.l.b16 %v1711
    %v1972 = vunpack.c.h.b16 %v1711
    %v1973 = vunpack.c.l.b16 %v1712
    %v1974 = vunpack.c.h.b16 %v1712
    %v1975 = vunpack.c.l.b16 %v1713
    %v1976 = vunpack.c.h.b16 %v1713
    %v1977 = vunpack.c.l.b16 %v1714
    %v1978 = vunpack.c.h.b16 %v1714
    %v1979 = vunpack.c.l.b16 %v1715
    %v1980 = vunpack.c.h.b16 %v1715
    %v1981 = vunpack.c.l.b16 %v1716
    %v1982 = vunpack.c.h.b16 %v1716
    %v1983 = vunpack.c.l.b16 %v1717
    %v1984 = vunpack.c.h.b16 %v1717
    %v1985 = vunpack.c.l.b16 %v1718
    %v1986 = vunpack.c.h.b16 %v1718
    %v1987 = vunpack.c.l.b16 %v1719
    %v1988 = vunpack.c.h.b16 %v1719
    %v1989 = vunpack.c.l.b16 %v1720
    %v1990 = vunpack.c.h.b16 %v1720
    %v1991 = vunpack.c.l.b16 %v1721
    %v1992 = vunpack.c.h.b16 %v1721
    %v1993 = vunpack.c.l.b16 %v1722
    %v1994 = vunpack.c.h.b16 %v1722
    %v1995 = vunpack.c.l.b16 %v1723
    %v1996 = vunpack.c.h.b16 %v1723
    %v1997 = vunpack.c.l.b16 %v1724
    %v1998 = vunpack.c.h.b16 %v1724
    %v1999 = vunpack.c.l.b16 %v1725
    %v2000 = vunpack.c.h.b16 %v1725
    %v2001 = vunpack.c.l.b16 %v1726
    %v2002 = vunpack.c.h.b16 %v1726
    %v2003 = vunpack.c.l.b16 %v1727
    %v2004 = vunpack.c.h.b16 %v1727
    %v2005 = vunpack.c.l.b16 %v1728
    %v2006 = vunpack.c.h.b16 %v1728
    %v2007 = vunpack.c.l.b16 %v1729
    %v2008 = vunpack.c.h.b16 %v1729
    %v2009 = vunpack.c.l.b16 %v1730
    %v2010 = vunpack.c.h.b16 %v1730
    %v2011 = vunpack.c.l.b16 %v1731
    %v2012 = vunpack.c.h.b16 %v1731
    %v2013 = vunpack.c.l.b16 %v1732
    %v2014 = vunpack.c.h.b16 %v1732
    %v2015 = vunpack.c.l.b16 %v1733
    %v2016 = vunpack.c.h.b16 %v1733
    %v2017 = vunpack.c.l.b16 %v1734
    %v2018 = vunpack.c.h.b16 %v1734
    %v2019 = vunpack.c.l.b16 %v1735
    %v2020 = vunpack.c.h.b16 %v1735
    %v2021 = vunpack.c.l.b16 %v1736
    %v2022 = vunpack.c.h.b16 %v1736
    %v2023 = vunpack.c.l.b16 %v1737
    %v2024 = vunpack.c.h.b16 %v1737
    %v2025 = vunpack.c.l.b16 %v1738
    %v2026 = vunpack.c.h.b16 %v1738
    %v2027 = vunpack.c.l.b16 %v1739
    %v2028 = vunpack.c.h.b16 %v1739
    %v2029 = vunpack.c.l.b16 %v1740
    %v2030 = vunpack.c.h.b16 %v1740
    %v2031 = vunpack.c.l.b16 %v1741
    %v2032 = vunpack.c.h.b16 %v1741
    %v2033 = vunpack.c.l.b16 %v1742
    %v2034 = vunpack.c.h.b16 %v1742
    %v2035 = vunpack.c.l.b16 %v1743
    %v2036 = vunpack.c.h.b16 %v1743
    %v2037 = vunpack.c.l.b16 %v1744
    %v2038 = vunpack.c.h.b16 %v1744
    %v2039 = vunpack.c.l.b16 %v1745
    %v2040 = vunpack.c.h.b16 %v1745
    %v2041 = vunpack.c.l.b16 %v1746
    %v2042 = vunpack.c.h.b16 %v1746
    %v2043 = vunpack.c.l.b16 %v1747
    %v2044 = vunpack.c.h.b16 %v1747
    %v2045 = vunpack.c.l.b16 %v1748
    %v2046 = vunpack.c.h.b16 %v1748
    %v2047 = vunpack.c.l.b16 %v1749
    %v2048 = vunpack.c.h.b16 %v1749
    %v2049 = vunpack.c.l.b16 %v1750
    %v2050 = vunpack.c.h.b16 %v1750
    %v2051 = vunpack.c.l.b16 %v1751
    %v2052 = vunpack.c.h.b16 %v1751
    %v2053 = vunpack.c.l.b16 %v1752
    %v2054 = vunpack.c.h.b16 %v1752
    %v2055 = vunpack.c.l.b16 %v1753
    %v2056 = vunpack.c.h.b16 %v1753
    %v2057 = vunpack.c.l.b16 %v1754
    %v2058 = vunpack.c.h.b16 %v1754
    %v2059 = vunpack.c.l.b16 %v1755
    %v2060 = vunpack.c.h.b16 %v1755
    %v2061 = vunpack.c.l.b16 %v1756
    %v2062 = vunpack.c.h.b16 %v1756
    %v2063 = vunpack.c.l.b16 %v1757
    %v2064 = vunpack.c.h.b16 %v1757
    %v2065 = vunpack.c.l.b16 %v1758
    %v2066 = vunpack.c.h.b16 %v1758
    %v2067 = vunpack.c.l.b16 %v1759
    %v2068 = vunpack.c.h.b16 %v1759
    %v2069 = vunpack.c.l.b16 %v1760
    %v2070 = vunpack.c.h.b16 %v1760
    %v2071 = vunpack.c.l.b16 %v1761
    %v2072 = vunpack.c.h.b16 %v1761
    %v2073 = vunpack.c.l.b16 %v1762
    %v2074 = vunpack.c.h.b16 %v1762
    %v2075 = vunpack.c.l.b16 %v1763
    %v2076 = vunpack.c.h.b16 %v1763
    %v2077 = vunpack.c.l.b16 %v1764
    %v2078 = vunpack.c.h.b16 %v1764
    %v2079 = vunpack.c.l.b16 %v1765
    %v2080 = vunpack.c.h.b16 %v1765
    %v2081 = vunpack.c.l.b16 %v1766
    %v2082 = vunpack.c.h.b16 %v1766
    %v2083 = vunpack.c.l.b16 %v1767
    %v2084 = vunpack.c.h.b16 %v1767
    %v2085 = vunpack.c.l.b16 %v1768
    %v2086 = vunpack.c.h.b16 %v1768
    %v2087 = vunpack.c.l.b16 %v1769
    %v2088 = vunpack.c.h.b16 %v1769
    %v2089 = vunpack.c.l.b16 %v1770
    %v2090 = vunpack.c.h.b16 %v1770
    %v2091 = vunpack.c.l.b16 %v1771
    %v2092 = vunpack.c.h.b16 %v1771
    %v2093 = vunpack.c.l.b16 %v1772
    %v2094 = vunpack.c.h.b16 %v1772
    %v2095 = vpack.c.b16 %v1899, %v1895
    %v2096 = vpack.c.b16 %v1900, %v1896
    %v2097 = vpack.c.b16 %v1901, %v1897
    %v2098 = vpack.c.b16 %v1902, %v1898
    %v2099 = vpack.c.b16 %v1907, %v1903
    %v2100 = vpack.c.b16 %v1908, %v1904
    %v2101 = vpack.c.b16 %v1909, %v1905
    %v2102 = vpack.c.b16 %v1910, %v1906
    %v2103 = vpack.c.b16 %v1915, %v1911
    %v2104 = vpack.c.b16 %v1916, %v1912
    %v2105 = vpack.c.b16 %v1917, %v1913
    %v2106 = vpack.c.b16 %v1918, %v1914
    %v2107 = vpack.c.b16 %v1923, %v1919
    %v2108 = vpack.c.b16 %v1924, %v1920
    %v2109 = vpack.c.b16 %v1925, %v1921
    %v2110 = vpack.c.b16 %v1926, %v1922
    %v2111 = vpack.c.b16 %v1931, %v1927
    %v2112 = vpack.c.b16 %v1932, %v1928
    %v2113 = vpack.c.b16 %v1933, %v1929
    %v2114 = vpack.c.b16 %v1934, %v1930
    %v2115 = vpack.c.b16 %v1939, %v1935
    %v2116 = vpack.c.b16 %v1940, %v1936
    %v2117 = vpack.c.b16 %v1941, %v1937
    %v2118 = vpack.c.b16 %v1942, %v1938
    %v2119 = vpack.c.b16 %v1947, %v1943
    %v2120 = vpack.c.b16 %v1948, %v1944
    %v2121 = vpack.c.b16 %v1949, %v1945
    %v2122 = vpack.c.b16 %v1950, %v1946
    %v2123 = vpack.c.b16 %v1955, %v1951
    %v2124 = vpack.c.b16 %v1956, %v1952
    %v2125 = vpack.c.b16 %v1957, %v1953
    %v2126 = vpack.c.b16 %v1958, %v1954
    %v2127 = vpack.c.b16 %v1963, %v1959
    %v2128 = vpack.c.b16 %v1964, %v1960
    %v2129 = vpack.c.b16 %v1965, %v1961
    %v2130 = vpack.c.b16 %v1966, %v1962
    %v2131 = vpack.c.b16 %v1971, %v1967
    %v2132 = vpack.c.b16 %v1972, %v1968
    %v2133 = vpack.c.b16 %v1973, %v1969
    %v2134 = vpack.c.b16 %v1974, %v1970
    %v2135 = vpack.c.b16 %v1979, %v1975
    %v2136 = vpack.c.b16 %v1980, %v1976
    %v2137 = vpack.c.b16 %v1981, %v1977
    %v2138 = vpack.c.b16 %v1982, %v1978
    %v2139 = vpack.c.b16 %v1987, %v1983
    %v2140 = vpack.c.b16 %v1988, %v1984
    %v2141 = vpack.c.b16 %v1989, %v1985
    %v2142 = vpack.c.b16 %v1990, %v1986
    %v2143 = vpack.c.b16 %v1995, %v1991
    %v2144 = vpack.c.b16 %v1996, %v1992
    %v2145 = vpack.c.b16 %v1997, %v1993
    %v2146 = vpack.c.b16 %v1998, %v1994
    %v2147 = vpack.c.b16 %v2003, %v1999
    %v2148 = vpack.c.b16 %v2004, %v2000
    %v2149 = vpack.c.b16 %v2005, %v2001
    %v2150 = vpack.c.b16 %v2006, %v2002
    %v2151 = vpack.c.b16 %v2011, %v2007
    %v2152 = vpack.c.b16 %v2012, %v2008
    %v2153 = vpack.c.b16 %v2013, %v2009
    %v2154 = vpack.c.b16 %v2014, %v2010
    %v2155 = vpack.c.b16 %v2019, %v2015
    %v2156 = vpack.c.b16 %v2020, %v2016
    %v2157 = vpack.c.b16 %v2021, %v2017
    %v2158 = vpack.c.b16 %v2022, %v2018
    %v2159 = vpack.c.b16 %v2027, %v2023
    %v2160 = vpack.c.b16 %v2028, %v2024
    %v2161 = vpack.c.b16 %v2029, %v2025
    %v2162 = vpack.c.b16 %v2030, %v2026
    %v2163 = vpack.c.b16 %v2035, %v2031
    %v2164 = vpack.c.b16 %v2036, %v2032
    %v2165 = vpack.c.b16 %v2037, %v2033
    %v2166 = vpack.c.b16 %v2038, %v2034
    %v2167 = vpack.c.b16 %v2043, %v2039
    %v2168 = vpack.c.b16 %v2044, %v2040
    %v2169 = vpack.c.b16 %v2045, %v2041
    %v2170 = vpack.c.b16 %v2046, %v2042
    %v2171 = vpack.c.b16 %v2051, %v2047
    %v2172 = vpack.c.b16 %v2052, %v2048
    %v2173 = vpack.c.b16 %v2053, %v2049
    %v2174 = vpack.c.b16 %v2054, %v2050
    %v2175 = vpack.c.b16 %v2059, %v2055
    %v2176 = vpack.c.b16 %v2060, %v2056
    %v2177 = vpack.c.b16 %v2061, %v2057
    %v2178 = vpack.c.b16 %v2062, %v2058
    %v2179 = vpack.c.b16 %v2067, %v2063
    %v2180 = vpack.c.b16 %v2068, %v2064
    %v2181 = vpack.c.b16 %v2069, %v2065
    %v2182 = vpack.c.b16 %v2070, %v2066
    %v2183 = vpack.c.b16 %v2075, %v2071
    %v2184 = vpack.c.b16 %v2076, %v2072
    %v2185 = vpack.c.b16 %v2077, %v2073
    %v2186 = vpack.c.b16 %v2078, %v2074
    %v2187 = vpack.c.b16 %v2083, %v2079
    %v2188 = vpack.c.b16 %v2084, %v2080
    %v2189 = vpack.c.b16 %v2085, %v2081
    %v2190 = vpack.c.b16 %v2086, %v2082
    %v2191 = vpack.c.b16 %v2091, %v2087
    %v2192 = vpack.c.b16 %v2092, %v2088
    %v2193 = vpack.c.b16 %v2093, %v2089
    %v2194 = vpack.c.b16 %v2094, %v2090
    %vm2295 = vcmask 130048
    %v2297 = vsel %vm2295, %v1672, 0
    %2299 = vmatprep.subr.bf16.mxu0 %v2124
    %2300 = vmatpush1.bf16.msra.mxu0 %v2123
    %2301 = vmatprep.subr.bf16.mxu0 %v2120
    %2302 = vmatpush1.bf16.msra.mxu0 %v2119
    %2303 = vmatprep.subr.bf16.mxu0 %v2116
    %2304 = vmatpush1.bf16.msra.mxu0 %v2115
    %2305 = vmatprep.subr.bf16.mxu0 %v2112
    %2306 = vmatpush1.bf16.msra.mxu0 %v2111
    %2307 = vmatprep.subr.bf16.mxu0 %v2108
    %2308 = vmatpush1.bf16.msra.mxu0 %v2107
    %2309 = vmatprep.subr.bf16.mxu0 %v2104
    %2310 = vmatpush1.bf16.msra.mxu0 %v2103
    %2311 = vmatprep.subr.bf16.mxu0 %v2100
    %2312 = vmatpush1.bf16.msra.mxu0 %v2099
    %2313 = vmatprep.subr.bf16.mxu0 %v2096
    %2314 = vmatpush1.bf16.msra.mxu0 %v2095
    %2315 = vmatprep.subr.bf16.mxu0 %v2156
    %2316 = vmatpush2.bf16.msra.mxu0 %v2155
    %2317 = vmatprep.subr.bf16.mxu0 %v2152
    %2318 = vmatpush2.bf16.msra.mxu0 %v2151
    %2319 = vmatprep.subr.bf16.mxu0 %v2148
    %2320 = vmatpush2.bf16.msra.mxu0 %v2147
    %2321 = vmatprep.subr.bf16.mxu0 %v2144
    %2322 = vmatpush2.bf16.msra.mxu0 %v2143
    %2323 = vmatprep.subr.bf16.mxu0 %v2140
    %2324 = vmatpush2.bf16.msra.mxu0 %v2139
    %2325 = vmatprep.subr.bf16.mxu0 %v2136
    %2326 = vmatpush2.bf16.msra.mxu0 %v2135
    %2327 = vmatprep.subr.bf16.mxu0 %v2132
    %2328 = vmatpush2.bf16.msra.mxu0 %v2131
    %2329 = vmatprep.subr.bf16.mxu0 %v2128
    %2330 = vmatpush2.bf16.msra.mxu0 %v2127
    %2331 = vmatprep.mubr.bf16.mxu0 %v1670
    %2332 = vmatmul.mubr.bf16.gmra.mxu0 %v1669
    %v2333 = vpop.f32.mrf.mxu0
    %v2334 = vadd.f32 %v1778, %v2333
    %v2335 = vpop.f32.mrf.mxu0
    %v2336 = vadd.f32 %v1782, %v2335
    %v2337 = vpop.f32.mrf.mxu0
    %v2338 = vpop.f32.mrf.mxu0
    %2339 = vdwg.mxu0
    %2340 = vmatprep.subr.bf16.mxu0 %v2188
    %2341 = vmatpush1.bf16.msra.mxu0 %v2187
    %2342 = vmatprep.subr.bf16.mxu0 %v2184
    %2343 = vmatpush1.bf16.msra.mxu0 %v2183
    %2344 = vmatprep.subr.bf16.mxu0 %v2180
    %2345 = vmatpush1.bf16.msra.mxu0 %v2179
    %2346 = vmatprep.subr.bf16.mxu0 %v2176
    %2347 = vmatpush1.bf16.msra.mxu0 %v2175
    %2348 = vmatprep.subr.bf16.mxu0 %v2172
    %2349 = vmatpush1.bf16.msra.mxu0 %v2171
    %2350 = vmatprep.subr.bf16.mxu0 %v2168
    %2351 = vmatpush1.bf16.msra.mxu0 %v2167
    %2352 = vmatprep.subr.bf16.mxu0 %v2164
    %2353 = vmatpush1.bf16.msra.mxu0 %v2163
    %2354 = vmatprep.subr.bf16.mxu0 %v2160
    %2355 = vmatpush1.bf16.msra.mxu0 %v2159
    %2356 = vmatprep.subr.bf16.mxu0 0
    %2357 = vmatpush2.bf16.msra.mxu0 0
    %2358 = vmatprep.subr.bf16.mxu0 0
    %2359 = vmatpush2.bf16.msra.mxu0 0
    %2360 = vmatprep.subr.bf16.mxu0 0
    %2361 = vmatpush2.bf16.msra.mxu0 0
    %2362 = vmatprep.subr.bf16.mxu0 0
    %2363 = vmatpush2.bf16.msra.mxu0 0
    %2364 = vmatprep.subr.bf16.mxu0 0
    %2365 = vmatpush2.bf16.msra.mxu0 0
    %2366 = vmatprep.subr.bf16.mxu0 0
    %2367 = vmatpush2.bf16.msra.mxu0 0
    %2368 = vmatprep.subr.bf16.mxu0 0
    %2369 = vmatpush2.bf16.msra.mxu0 0
    %2370 = vmatprep.subr.bf16.mxu0 %v2192
    %2371 = vmatpush2.bf16.msra.mxu0 %v2191
    %2372 = vmatprep.mubr.bf16.mxu0 %v2297
    %2373 = vmatmul.mubr.bf16.gmra.mxu0 %v1671
    %v2374 = vpop.f32.mrf.mxu0
    %v2375 = vadd.f32 %v2334, %v2374
    %v2376 = vpop.f32.mrf.mxu0
    %v2377 = vadd.f32 %v2336, %v2376
    %v2378 = vpop.f32.mrf.mxu0
    %v2379 = vpop.f32.mrf.mxu0
    %2380 = vdwg.mxu0
    %2381 = vmatprep.subr.bf16.mxu0 %v2126
    %2382 = vmatpush1.bf16.msra.mxu0 %v2125
    %2383 = vmatprep.subr.bf16.mxu0 %v2122
    %2384 = vmatpush1.bf16.msra.mxu0 %v2121
    %2385 = vmatprep.subr.bf16.mxu0 %v2118
    %2386 = vmatpush1.bf16.msra.mxu0 %v2117
    %2387 = vmatprep.subr.bf16.mxu0 %v2114
    %2388 = vmatpush1.bf16.msra.mxu0 %v2113
    %2389 = vmatprep.subr.bf16.mxu0 %v2110
    %2390 = vmatpush1.bf16.msra.mxu0 %v2109
    %2391 = vmatprep.subr.bf16.mxu0 %v2106
    %2392 = vmatpush1.bf16.msra.mxu0 %v2105
    %2393 = vmatprep.subr.bf16.mxu0 %v2102
    %2394 = vmatpush1.bf16.msra.mxu0 %v2101
    %2395 = vmatprep.subr.bf16.mxu0 %v2098
    %2396 = vmatpush1.bf16.msra.mxu0 %v2097
    %2397 = vmatprep.subr.bf16.mxu0 %v2158
    %2398 = vmatpush2.bf16.msra.mxu0 %v2157
    %2399 = vmatprep.subr.bf16.mxu0 %v2154
    %2400 = vmatpush2.bf16.msra.mxu0 %v2153
    %2401 = vmatprep.subr.bf16.mxu0 %v2150
    %2402 = vmatpush2.bf16.msra.mxu0 %v2149
    %2403 = vmatprep.subr.bf16.mxu0 %v2146
    %2404 = vmatpush2.bf16.msra.mxu0 %v2145
    %2405 = vmatprep.subr.bf16.mxu0 %v2142
    %2406 = vmatpush2.bf16.msra.mxu0 %v2141
    %2407 = vmatprep.subr.bf16.mxu0 %v2138
    %2408 = vmatpush2.bf16.msra.mxu0 %v2137
    %2409 = vmatprep.subr.bf16.mxu0 %v2134
    %2410 = vmatpush2.bf16.msra.mxu0 %v2133
    %2411 = vmatprep.subr.bf16.mxu0 %v2130
    %2412 = vmatpush2.bf16.msra.mxu0 %v2129
    %2413 = vmatprep.mubr.bf16.mxu0 %v1670
    %2414 = vmatmul.mubr.bf16.gmra.mxu0 %v1669
    %v2415 = vpop.f32.mrf.mxu0
    %v2416 = vadd.f32 %v1786, %v2415
    %v2417 = vpop.f32.mrf.mxu0
    %v2418 = vadd.f32 %v1790, %v2417
    %v2419 = vpop.f32.mrf.mxu0
    %v2420 = vpop.f32.mrf.mxu0
    %2421 = vdwg.mxu0
    %2422 = vmatprep.subr.bf16.mxu0 %v2190
    %2423 = vmatpush1.bf16.msra.mxu0 %v2189
    %2424 = vmatprep.subr.bf16.mxu0 %v2186
    %2425 = vmatpush1.bf16.msra.mxu0 %v2185
    %2426 = vmatprep.subr.bf16.mxu0 %v2182
    %2427 = vmatpush1.bf16.msra.mxu0 %v2181
    %2428 = vmatprep.subr.bf16.mxu0 %v2178
    %2429 = vmatpush1.bf16.msra.mxu0 %v2177
    %2430 = vmatprep.subr.bf16.mxu0 %v2174
    %2431 = vmatpush1.bf16.msra.mxu0 %v2173
    %2432 = vmatprep.subr.bf16.mxu0 %v2170
    %2433 = vmatpush1.bf16.msra.mxu0 %v2169
    %2434 = vmatprep.subr.bf16.mxu0 %v2166
    %2435 = vmatpush1.bf16.msra.mxu0 %v2165
    %2436 = vmatprep.subr.bf16.mxu0 %v2162
    %2437 = vmatpush1.bf16.msra.mxu0 %v2161
    %2438 = vmatprep.subr.bf16.mxu0 0
    %2439 = vmatpush2.bf16.msra.mxu0 0
    %2440 = vmatprep.subr.bf16.mxu0 0
    %2441 = vmatpush2.bf16.msra.mxu0 0
    %2442 = vmatprep.subr.bf16.mxu0 0
    %2443 = vmatpush2.bf16.msra.mxu0 0
    %2444 = vmatprep.subr.bf16.mxu0 0
    %2445 = vmatpush2.bf16.msra.mxu0 0
    %2446 = vmatprep.subr.bf16.mxu0 0
    %2447 = vmatpush2.bf16.msra.mxu0 0
    %2448 = vmatprep.subr.bf16.mxu0 0
    %2449 = vmatpush2.bf16.msra.mxu0 0
    %2450 = vmatprep.subr.bf16.mxu0 0
    %2451 = vmatpush2.bf16.msra.mxu0 0
    %2452 = vmatprep.subr.bf16.mxu0 %v2194
    %2453 = vmatpush2.bf16.msra.mxu0 %v2193
    %2454 = vmatprep.mubr.bf16.mxu0 %v2297
    %2455 = vmatmul.mubr.bf16.gmra.mxu0 %v1671
    %v2456 = vpop.f32.mrf.mxu0
    %v2457 = vadd.f32 %v2416, %v2456
    %v2458 = vpop.f32.mrf.mxu0
    %v2459 = vadd.f32 %v2418, %v2458
    %v2460 = vpop.f32.mrf.mxu0
    %v2461 = vpop.f32.mrf.mxu0
    %2462 = vdwg.mxu0
    %v2463 = vmul.f32 %v2375, 0.5
    %v2464 = vmul.f32 %v2377, 0.5
    %v2465 = vmul.f32 %v2457, 0.5
    %v2466 = vmul.f32 %v2459, 0.5
    %v2467 = vmul.f32 %v2375, 0.044715
    %v2468 = vmul.f32 %v2377, 0.044715
    %v2469 = vmul.f32 %v2457, 0.044715
    %v2470 = vmul.f32 %v2459, 0.044715
    %v2471 = vmul.f32 %v2467, %v2375
    %v2472 = vmul.f32 %v2468, %v2377
    %v2473 = vmul.f32 %v2469, %v2457
    %v2474 = vmul.f32 %v2470, %v2459
    %v2475 = vmul.f32 %v2471, %v2375
    %v2476 = vmul.f32 %v2472, %v2377
    %v2477 = vmul.f32 %v2473, %v2457
    %v2478 = vmul.f32 %v2474, %v2459
    %v2479 = vadd.f32 %v2375, %v2475
    %v2480 = vadd.f32 %v2377, %v2476
    %v2481 = vadd.f32 %v2457, %v2477
    %v2482 = vadd.f32 %v2459, %v2478
    %v2483 = vmul.f32 %v2479, 0.7978846
    %v2484 = vmul.f32 %v2480, 0.7978846
    %v2485 = vmul.f32 %v2481, 0.7978846
    %v2486 = vmul.f32 %v2482, 0.7978846
    %v2487 = vtanh.pop %v2483
    %v2488 = vtanh.pop %v2484
    %v2489 = vtanh.pop %v2485
    %v2490 = vtanh.pop %v2486
    %v2491 = vadd.f32 %v2487, 1.0
    %v2492 = vadd.f32 %v2488, 1.0
    %v2493 = vadd.f32 %v2489, 1.0
    %v2494 = vadd.f32 %v2490, 1.0
    %v2495 = vmul.f32 %v2463, %v2491
    %v2496 = vmul.f32 %v2464, %v2492
    %v2497 = vmul.f32 %v2465, %v2493
    %v2498 = vmul.f32 %v2466, %v2494
    %v2499 = vpack.c.bf16 %v2495, %v2495
    %v2500 = vpack.c.bf16 %v2496, %v2496
    %v2501 = vpack.c.bf16 %v2497, %v2497
    %v2502 = vpack.c.bf16 %v2498, %v2498
    %v2503 = vld [vmem:[%s5] sm:$0xf]
    %v2504 = vld [vmem:[%s5 + $0x4] sm:$0xf]
    %v2505 = vld [vmem:[%s5 + $0x8] sm:$0xf]
    %v2506 = vld [vmem:[%s5 + $0xc] sm:$0xf]
    %v2507 = vld [vmem:[%s5 + $0x10] sm:$0xf]
    %v2508 = vld [vmem:[%s5 + $0x14] sm:$0xf]
    %v2509 = vld [vmem:[%s5 + $0x18] sm:$0xf]
    %v2510 = vld [vmem:[%s5 + $0x1c] sm:$0xf]
    %v2511 = vld [vmem:[%s5 + $0x20] sm:$0xf]
    %v2512 = vld [vmem:[%s5 + $0x24] sm:$0xf]
    %v2513 = vld [vmem:[%s5 + $0x28] sm:$0xf]
    %v2514 = vld [vmem:[%s5 + $0x2c] sm:$0xf]
    %v2515 = vld [vmem:[%s5 + $0x30] sm:$0xf]
    %v2516 = vld [vmem:[%s5 + $0x34] sm:$0xf]
    %v2517 = vld [vmem:[%s5 + $0x38] sm:$0xf]
    %v2518 = vld [vmem:[%s5 + $0x3c] sm:$0xf]
    %v2519 = vld [vmem:[%s5 + $0x40] sm:$0xf]
    %v2520 = vld [vmem:[%s5 + $0x44] sm:$0xf]
    %v2521 = vld [vmem:[%s5 + $0x48] sm:$0xf]
    %v2522 = vld [vmem:[%s5 + $0x4c] sm:$0xf]
    %v2523 = vld [vmem:[%s5 + $0x50] sm:$0xf]
    %v2524 = vld [vmem:[%s5 + $0x54] sm:$0xf]
    %v2525 = vld [vmem:[%s5 + $0x58] sm:$0xf]
    %v2526 = vld [vmem:[%s5 + $0x5c] sm:$0xf]
    %v2527 = vld [vmem:[%s5 + $0x60] sm:$0xf]
    %v2528 = vld [vmem:[%s5 + $0x64] sm:$0xf]
    %v2529 = vld [vmem:[%s5 + $0x68] sm:$0xf]
    %v2530 = vld [vmem:[%s5 + $0x6c] sm:$0xf]
    %v2531 = vld [vmem:[%s5 + $0x70] sm:$0xf]
    %v2532 = vld [vmem:[%s5 + $0x74] sm:$0xf]
    %v2533 = vld [vmem:[%s5 + $0x78] sm:$0xf]
    %v2534 = vld [vmem:[%s5 + $0x7c] sm:$0xf]
    %v2535 = vld [vmem:[%s5 + $0x80] sm:$0xf]
    %v2536 = vld [vmem:[%s5 + $0x84] sm:$0xf]
    %v2537 = vld [vmem:[%s5 + $0x88] sm:$0xf]
    %v2538 = vld [vmem:[%s5 + $0x8c] sm:$0xf]
    %v2539 = vld [vmem:[%s5 + $0x90] sm:$0xf]
    %v2540 = vld [vmem:[%s5 + $0x94] sm:$0xf]
    %v2541 = vld [vmem:[%s5 + $0x98] sm:$0xf]
    %v2542 = vld [vmem:[%s5 + $0x9c] sm:$0xf]
    %v2543 = vld [vmem:[%s5 + $0xa0] sm:$0xf]
    %v2544 = vld [vmem:[%s5 + $0xa4] sm:$0xf]
    %v2545 = vld [vmem:[%s5 + $0xa8] sm:$0xf]
    %v2546 = vld [vmem:[%s5 + $0xac] sm:$0xf]
    %v2547 = vld [vmem:[%s5 + $0xb0] sm:$0xf]
    %v2548 = vld [vmem:[%s5 + $0xb4] sm:$0xf]
    %v2549 = vld [vmem:[%s5 + $0xb8] sm:$0xf]
    %v2550 = vld [vmem:[%s5 + $0xbc] sm:$0xf]
    %v2551 = vld [vmem:[%s5 + $0xc0] sm:$0xf]
    %v2552 = vld [vmem:[%s5 + $0xc4] sm:$0xf]
    %v2553 = vld [vmem:[%s6] sm:$0x1]
    %v2555 = vlaneseq
    %v2556 = vshrl.u32 %v2555, 7
    %v2557 = vsub.s32 0, %v2556
    %v2558 = vrot.slane %v2553, %v2557
    %v2610 = vunpack.c.l.b16 %v2503
    %v2611 = vunpack.c.l.b16 %v2504
    %v2612 = vunpack.c.l.b16 %v2505
    %v2613 = vunpack.c.l.b16 %v2506
    %v2614 = vunpack.c.l.b16 %v2507
    %v2615 = vunpack.c.l.b16 %v2508
    %v2616 = vunpack.c.l.b16 %v2509
    %v2617 = vunpack.c.l.b16 %v2510
    %v2618 = vunpack.c.l.b16 %v2511
    %v2619 = vunpack.c.l.b16 %v2512
    %v2620 = vunpack.c.l.b16 %v2513
    %v2621 = vunpack.c.l.b16 %v2514
    %v2622 = vunpack.c.l.b16 %v2515
    %v2623 = vunpack.c.l.b16 %v2516
    %v2624 = vunpack.c.l.b16 %v2517
    %v2625 = vunpack.c.l.b16 %v2518
    %v2626 = vunpack.c.l.b16 %v2519
    %v2627 = vunpack.c.l.b16 %v2520
    %v2628 = vunpack.c.l.b16 %v2521
    %v2629 = vunpack.c.l.b16 %v2522
    %v2630 = vunpack.c.l.b16 %v2523
    %v2631 = vunpack.c.l.b16 %v2524
    %v2632 = vunpack.c.l.b16 %v2525
    %v2633 = vunpack.c.l.b16 %v2526
    %v2634 = vunpack.c.l.b16 %v2527
    %v2635 = vunpack.c.l.b16 %v2528
    %v2636 = vunpack.c.l.b16 %v2529
    %v2637 = vunpack.c.l.b16 %v2530
    %v2638 = vunpack.c.l.b16 %v2531
    %v2639 = vunpack.c.l.b16 %v2532
    %v2640 = vunpack.c.l.b16 %v2533
    %v2641 = vunpack.c.l.b16 %v2534
    %v2642 = vunpack.c.l.b16 %v2535
    %v2643 = vunpack.c.l.b16 %v2536
    %v2644 = vunpack.c.l.b16 %v2537
    %v2645 = vunpack.c.l.b16 %v2538
    %v2646 = vunpack.c.l.b16 %v2539
    %v2647 = vunpack.c.l.b16 %v2540
    %v2648 = vunpack.c.l.b16 %v2541
    %v2649 = vunpack.c.l.b16 %v2542
    %v2650 = vunpack.c.l.b16 %v2543
    %v2651 = vunpack.c.l.b16 %v2544
    %v2652 = vunpack.c.l.b16 %v2545
    %v2653 = vunpack.c.l.b16 %v2546
    %v2654 = vunpack.c.l.b16 %v2547
    %v2655 = vunpack.c.l.b16 %v2548
    %v2656 = vunpack.c.l.b16 %v2549
    %v2657 = vunpack.c.l.b16 %v2550
    %v2658 = vunpack.c.l.b16 %v2551
    %v2659 = vunpack.c.l.b16 %v2552
    %v2660 = vpack.c.b16 %v2611, %v2610
    %v2661 = vpack.c.b16 %v2613, %v2612
    %v2662 = vpack.c.b16 %v2615, %v2614
    %v2663 = vpack.c.b16 %v2617, %v2616
    %v2664 = vpack.c.b16 %v2619, %v2618
    %v2665 = vpack.c.b16 %v2621, %v2620
    %v2666 = vpack.c.b16 %v2623, %v2622
    %v2667 = vpack.c.b16 %v2625, %v2624
    %v2668 = vpack.c.b16 %v2627, %v2626
    %v2669 = vpack.c.b16 %v2629, %v2628
    %v2670 = vpack.c.b16 %v2631, %v2630
    %v2671 = vpack.c.b16 %v2633, %v2632
    %v2672 = vpack.c.b16 %v2635, %v2634
    %v2673 = vpack.c.b16 %v2637, %v2636
    %v2674 = vpack.c.b16 %v2639, %v2638
    %v2675 = vpack.c.b16 %v2641, %v2640
    %v2676 = vpack.c.b16 %v2643, %v2642
    %v2677 = vpack.c.b16 %v2645, %v2644
    %v2678 = vpack.c.b16 %v2647, %v2646
    %v2679 = vpack.c.b16 %v2649, %v2648
    %v2680 = vpack.c.b16 %v2651, %v2650
    %v2681 = vpack.c.b16 %v2653, %v2652
    %v2682 = vpack.c.b16 %v2655, %v2654
    %v2683 = vpack.c.b16 %v2657, %v2656
    %v2684 = vpack.c.b16 %v2659, %v2658
    %v2711 = vsel %vm2295, %v2502, 0
    %2713 = vmatprep.subr.bf16.mxu0 0
    %2714 = vmatpush1.bf16.msra.mxu0 %v2667
    %2715 = vmatprep.subr.bf16.mxu0 0
    %2716 = vmatpush1.bf16.msra.mxu0 %v2666
    %2717 = vmatprep.subr.bf16.mxu0 0
    %2718 = vmatpush1.bf16.msra.mxu0 %v2665
    %2719 = vmatprep.subr.bf16.mxu0 0
    %2720 = vmatpush1.bf16.msra.mxu0 %v2664
    %2721 = vmatprep.subr.bf16.mxu0 0
    %2722 = vmatpush1.bf16.msra.mxu0 %v2663
    %2723 = vmatprep.subr.bf16.mxu0 0
    %2724 = vmatpush1.bf16.msra.mxu0 %v2662
    %2725 = vmatprep.subr.bf16.mxu0 0
    %2726 = vmatpush1.bf16.msra.mxu0 %v2661
    %2727 = vmatprep.subr.bf16.mxu0 0
    %2728 = vmatpush1.bf16.msra.mxu0 %v2660
    %2729 = vmatprep.subr.bf16.mxu0 0
    %2730 = vmatpush2.bf16.msra.mxu0 %v2675
    %2731 = vmatprep.subr.bf16.mxu0 0
    %2732 = vmatpush2.bf16.msra.mxu0 %v2674
    %2733 = vmatprep.subr.bf16.mxu0 0
    %2734 = vmatpush2.bf16.msra.mxu0 %v2673
    %2735 = vmatprep.subr.bf16.mxu0 0
    %2736 = vmatpush2.bf16.msra.mxu0 %v2672
    %2737 = vmatprep.subr.bf16.mxu0 0
    %2738 = vmatpush2.bf16.msra.mxu0 %v2671
    %2739 = vmatprep.subr.bf16.mxu0 0
    %2740 = vmatpush2.bf16.msra.mxu0 %v2670
    %2741 = vmatprep.subr.bf16.mxu0 0
    %2742 = vmatpush2.bf16.msra.mxu0 %v2669
    %2743 = vmatprep.subr.bf16.mxu0 0
    %2744 = vmatpush2.bf16.msra.mxu0 %v2668
    %2745 = vmatprep.mubr.bf16.mxu0 %v2500
    %2746 = vmatmul.mubr.bf16.gmra.mxu0 %v2499
    %v2747 = vpop.f32.mrf.mxu0
    %v2748 = vadd.f32 %v2558, %v2747
    %v2749 = vpop.f32.mrf.mxu0
    %v2750 = vpop.f32.mrf.mxu0
    %v2751 = vpop.f32.mrf.mxu0
    %2752 = vdwg.mxu0
    %2753 = vmatprep.subr.bf16.mxu0 0
    %2754 = vmatpush1.bf16.msra.mxu0 %v2683
    %2755 = vmatprep.subr.bf16.mxu0 0
    %2756 = vmatpush1.bf16.msra.mxu0 %v2682
    %2757 = vmatprep.subr.bf16.mxu0 0
    %2758 = vmatpush1.bf16.msra.mxu0 %v2681
    %2759 = vmatprep.subr.bf16.mxu0 0
    %2760 = vmatpush1.bf16.msra.mxu0 %v2680
    %2761 = vmatprep.subr.bf16.mxu0 0
    %2762 = vmatpush1.bf16.msra.mxu0 %v2679
    %2763 = vmatprep.subr.bf16.mxu0 0
    %2764 = vmatpush1.bf16.msra.mxu0 %v2678
    %2765 = vmatprep.subr.bf16.mxu0 0
    %2766 = vmatpush1.bf16.msra.mxu0 %v2677
    %2767 = vmatprep.subr.bf16.mxu0 0
    %2768 = vmatpush1.bf16.msra.mxu0 %v2676
    %2769 = vmatprep.subr.bf16.mxu0 0
    %2770 = vmatpush2.bf16.msra.mxu0 0
    %2771 = vmatprep.subr.bf16.mxu0 0
    %2772 = vmatpush2.bf16.msra.mxu0 0
    %2773 = vmatprep.subr.bf16.mxu0 0
    %2774 = vmatpush2.bf16.msra.mxu0 0
    %2775 = vmatprep.subr.bf16.mxu0 0
    %2776 = vmatpush2.bf16.msra.mxu0 0
    %2777 = vmatprep.subr.bf16.mxu0 0
    %2778 = vmatpush2.bf16.msra.mxu0 0
    %2779 = vmatprep.subr.bf16.mxu0 0
    %2780 = vmatpush2.bf16.msra.mxu0 0
    %2781 = vmatprep.subr.bf16.mxu0 0
    %2782 = vmatpush2.bf16.msra.mxu0 0
    %2783 = vmatprep.subr.bf16.mxu0 0
    %2784 = vmatpush2.bf16.msra.mxu0 %v2684
    %2785 = vmatprep.mubr.bf16.mxu0 %v2711
    %2786 = vmatmul.mubr.bf16.gmra.mxu0 %v2501
    %v2787 = vpop.f32.mrf.mxu0
    %v2788 = vadd.f32 %v2748, %v2787
    %v2789 = vpop.f32.mrf.mxu0
    %v2790 = vpop.f32.mrf.mxu0
    %v2791 = vpop.f32.mrf.mxu0
    %2792 = vdwg.mxu0
    %vm2793 = vcmask 173056
    %2794 = vst.msk [vmem:[#allocation2] sm:$0x3] %vm2793, %v2788
    // Predicated region
    $region30: #{tpu_custom_call.1} parent=1 // pred_check
      _
    $region31: #{tpu_custom_call.1} parent=1 // pred_check_branch
      %2796 = sbr.rel (0) target = $region33
    $region32: #{tpu_custom_call.1} parent=1 // pred_region
      %s2798 = ssub.s32 32, 32
      %2799 = vsyncadd [#allocation3], %s2798
      %s2801 = sshll.u32 [#allocation2], 4
      %s2802 = int_to_ptr.vmem [resolvable:$true] %s2801
      %2804 = dma.vmem_to_hbm [thread:$0]  %s2802, 32, %s7, [#allocation3]
    $region33: #{tpu_custom_call.1} parent=1 // pred_fallthru
      _
    // Predicated region
    $region34: #{tpu_custom_call.1} parent=1 // pred_check
      _
    $region35: #{tpu_custom_call.1} parent=1 // pred_check_branch
      %2806 = sbr.rel (0) target = $region37
    $region36: #{tpu_custom_call.1} parent=1 // pred_region
      %2807 = dma.done [#allocation3], 32
    $region37: #{tpu_custom_call.1} parent=1 // pred_fallthru
      _
    %2808 = vsyncpa [#allocation3], 1

</llo_original>
